<compile_context>
chip_gen: v5e
topology: v5e:2x2
jax: 0.10.0
libtpu: 0.0.40
codegen_flags: <defaults>
</compile_context>

<pallas_src>
import functools

import jax
import jax.numpy as jnp
from jax.experimental import pallas as pl
from jax.experimental.pallas import tpu as pltpu


# ----------------------------- fused Pallas kernel ---------------------------

def _fa_chain_kernel(x_ref, w_ref, s_ref, b_ref, o_ref, lvl_ref, *,
                     num_layers, fracparam, sub_tiles, reuse_slot):
    """Fused fractal chain over one NCHW block.

    x_ref  : (1, C, tile_hw)        f32   input slab (level_0), channel-major
    w_ref  : (L, C, C)              bf16  raw conv1x1 weights (out, in)
    s_ref  : (L, C, 1)              f32   BN per-channel scale  (gamma / sqrt(var+eps))
    b_ref  : (L, C, 1)              f32   BN per-channel shift  (beta - mean*scale)
    o_ref  : (1, C, tile_hw)        out   output = level_L
    lvl_ref: (n_slots, C, sub_hw)   f32   VMEM scratch holding only *reused* levels
    """
    for lo, sz in sub_tiles:                      # static spatial sub-tiles
        cur = x_ref[0, :, lo:lo + sz].astype(jnp.bfloat16)   # (C, sz) bf16 -> MXU
        y = None
        for l in range(num_layers):               # statically unrolled (L small)
            # 1x1 conv as channel-major matmul, f32 accumulation on the MXU.
            y = jnp.dot(w_ref[l], cur, preferred_element_type=jnp.float32)
            # Exact f32 BN epilogue + ReLU (VPU).
            y = y * s_ref[l] + b_ref[l]
            y = jnp.maximum(y, 0.0)
            # Fractal skip additions at power-of-fracparam distances; the
            # referenced levels live in VMEM scratch (no HBM traffic, no
            # long-lived vreg values).
            d = fracparam
            while d <= l:
                y = y + lvl_ref[reuse_slot[l + 1 - d], :, 0:sz]
                d *= fracparam
            # Store this level only if some later layer will read it.
            if (l + 1) in reuse_slot:
                lvl_ref[reuse_slot[l + 1], :, 0:sz] = y
            cur = y.astype(jnp.bfloat16)
        o_ref[0, :, lo:lo + sz] = y.astype(o_ref.dtype)


# ------------------------------ tiling heuristics ----------------------------

def _sub_of(t):
    if t % 256 == 0:
        return 256
    if t % 128 == 0:
        return 128
    return min(t, 256)


def _vmem_estimate(tile_hw, sub_hw, C, L, n_slots):
    """Rough padded-VMEM residency (bytes) for one core."""
    cpad = -(-C // 8) * 8
    cl = -(-C // 128) * 128
    tpad = -(-tile_hw // 128) * 128
    spad = -(-sub_hw // 128) * 128
    act = 2 * 2 * cpad * tpad * 4           # x + out blocks, double-buffered, f32
    wgt = 2 * L * cpad * cl * 2             # weights (L,C,C) bf16, 2 buffers
    vec = 2 * 2 * L * cpad * 128 * 4        # scale + bias (L,C,1) f32, lane-padded
    lvl = n_slots * cpad * spad * 4         # level scratch
    return act + wgt + vec + lvl


def _pick_tiles(B, HW, C, L, n_slots, vmem_budget=24 << 20, target_blocks=8):
    """Largest spatial tile that fits the VMEM budget while giving >= 8 grid
    blocks if possible (>= 4 keeps both v7x TensorCores pipelined)."""
    cands = sorted({t for t in range(128, HW + 1, 128) if HW % t == 0} | {HW},
                   reverse=True)
    feasible = [t for t in cands
                if _vmem_estimate(t, _sub_of(t), C, L, n_slots) <= vmem_budget]
    if not feasible:
        feasible = [cands[-1]]
    for need in (target_blocks, 4, 2, 1):
        for t in feasible:                   # descending: biggest tile meeting `need`
            if B * (HW // t) >= need:
                return t, _sub_of(t)
    t = feasible[-1]
    return t, _sub_of(t)


# --------------------------- FABigBlock forward ------------------------------

def fa_big_block_forward(x_nchw, w_stack, scale_stack, bias_stack, *,
                         fracparam=2, tile_hw=None, out_dtype=jnp.float32):
    """Fractal chain of ReLU(BN(Conv1x1)) blocks.  Input/output are NCHW."""
    B, C, H, W = x_nchw.shape
    L = int(w_stack.shape[0])
    assert L >= 1, "need at least one layer"
    HW = H * W

    # Levels m (1-indexed) are re-read by a later layer iff m + fracparam <= L.
    reused = list(range(1, max(0, L - fracparam) + 1))
    reuse_slot = {m: i for i, m in enumerate(reused)}
    n_slots = max(1, len(reused))

    if tile_hw is None:
        tile_hw, sub_hw = _pick_tiles(B, HW, C, L, n_slots)
    else:
        assert HW % tile_hw == 0, (HW, tile_hw)
        sub_hw = _sub_of(tile_hw)

    # Static sub-tile schedule (ragged tail allowed, offsets stay lane-aligned).
    sub_tiles, off = [], 0
    while off < tile_hw:
        sz = min(sub_hw, tile_hw - off)
        sub_tiles.append((off, sz))
        off += sz
    sub_tiles = tuple(sub_tiles)

    x = x_nchw.reshape(B, C, HW)   # contiguous view -> free, stays NCHW in HBM

    kernel = functools.partial(
        _fa_chain_kernel, num_layers=L, fracparam=fracparam,
        sub_tiles=sub_tiles, reuse_slot=reuse_slot)

    out = pl.pallas_call(
        kernel,
        out_shape=jax.ShapeDtypeStruct((B, C, HW), out_dtype),
        grid_spec=pltpu.PrefetchScalarGridSpec(
            num_scalar_prefetch=0,
            grid=(B, HW // tile_hw),
            in_specs=[
                pl.BlockSpec((1, C, tile_hw), lambda b, j: (b, 0, j)),   # x slab
                # Constant block index => DMA'd once per core, resident after.
                pl.BlockSpec((L, C, C), lambda b, j: (0, 0, 0)),         # weights
                pl.BlockSpec((L, C, 1), lambda b, j: (0, 0, 0)),         # BN scale
                pl.BlockSpec((L, C, 1), lambda b, j: (0, 0, 0)),         # BN shift
            ],
            out_specs=pl.BlockSpec((1, C, tile_hw), lambda b, j: (b, 0, j)),
            scratch_shapes=[pltpu.VMEM((n_slots, C, sub_hw), jnp.float32)],
        ),
        compiler_params=pltpu.CompilerParams(
            dimension_semantics=("parallel", "parallel"),
            vmem_limit_bytes=32 * 1024 * 1024),
    )(x, w_stack, scale_stack, bias_stack)

    return out.reshape(B, C, H, W)


# ------------------------ deterministic parameter init -----------------------

def init_params(key, num_layers, C, eps=1e-5):
    """Conv1x1 + BatchNorm (inference) params, PyTorch-style init.

    Returns raw bf16 conv weights (out, in) plus f32 per-channel BN scale/shift
    (applied exactly in the kernel epilogue instead of being folded into bf16).
    """
    ws, ss, bs = [], [], []
    for _ in range(num_layers):
        key, k = jax.random.split(key)
        n = 1 * 1 * C                                   # kh*kw*out_channels
        w = jax.random.normal(k, (C, C), jnp.float32) * jnp.sqrt(2.0 / n)
        gamma = jnp.ones((C,), jnp.float32)
        beta = jnp.zeros((C,), jnp.float32)
        mean = jnp.zeros((C,), jnp.float32)
        var = jnp.ones((C,), jnp.float32)
        inv = gamma / jnp.sqrt(var + eps)
        ws.append(w)                                    # (C_out, C_in)
        ss.append(inv.reshape(C, 1))
        bs.append((beta - mean * inv).reshape(C, 1))
    return (jnp.stack(ws).astype(jnp.bfloat16),         # (L, C, C) bf16
            jnp.stack(ss).astype(jnp.float32),          # (L, C, 1) f32
            jnp.stack(bs).astype(jnp.float32))          # (L, C, 1) f32


# ------------------------------ pure-JAX references --------------------------

def reference_forward(x_nchw, w_stack, scale_stack, bias_stack, fracparam=2,
                      matmul_dtype=jnp.bfloat16):
    """Same math in plain JAX/XLA.  matmul_dtype=bf16 matches the kernel's MXU
    precision; matmul_dtype=f32 quantifies the accumulated bf16 activation
    rounding against a full-precision chain (same bf16-rounded weights)."""
    B, C, H, W = x_nchw.shape
    L = w_stack.shape[0]
    x = x_nchw.reshape(B, C, H * W)
    w = w_stack.astype(matmul_dtype)
    cur = x.astype(matmul_dtype)
    levels = [None]
    for l in range(L):
        y = jnp.einsum('oc,bcs->bos', w[l], cur,
                       preferred_element_type=jnp.float32)
        y = jnp.maximum(y * scale_stack[l][None] + bias_stack[l][None], 0.0)
        d = fracparam
        while d <= l:
            y = y + levels[l + 1 - d]
            d *= fracparam
        levels.append(y)
        cur = y.astype(matmul_dtype)
    return levels[L].reshape(B, C, H, W)


if __name__ == "__main__":
    key = jax.random.PRNGKey(0)
    kx, kp = jax.random.split(key)

    # Small shapes: batch=2, channels=128 (lane-aligned), spatial 16x16
    # -> HW = 256 per image -> tile_hw=128 gives 4 grid blocks (2 per v7x TC);
    # 5 layers exercise fractal skips at distances 2 and 4.
    B, C, H, W = 2, 128, 16, 16
    num_layers = 5

    # TODO(synk): the literal FABigBlock.forward is exec-based with an empty
    # __init__ and never adds the fractal skips nor returns; we implement the
    # documented fractal semantics (from _make_fractal_layer) and return the
    # last level.
    x = jax.random.normal(kx, (B, C, H, W), jnp.float32)
    w_stack, scale_stack, bias_stack = init_params(kp, num_layers, C)

    out = fa_big_block_forward(x, w_stack, scale_stack, bias_stack, fracparam=2)
    out = jax.block_until_ready(out)

    assert out.shape == (B, C, H, W)
    assert bool(jnp.all(jnp.isfinite(out)))

    # Matched-precision reference (bf16 MXU inputs, f32 accumulation/epilogue).
    ref = reference_forward(x, w_stack, scale_stack, bias_stack, fracparam=2)
    rel = float(jnp.max(jnp.abs(out - ref)) / (jnp.max(jnp.abs(ref)) + 1e-6))
    assert rel < 1e-2, f"mismatch vs matched-precision reference: rel err {rel}"

    # Quantify accumulated bf16 activation rounding vs. an f32 activation chain
    # (same bf16-rounded weights).  Loose bound; documents precision drift.
    ref32 = reference_forward(x, w_stack, scale_stack, bias_stack, fracparam=2,
                              matmul_dtype=jnp.float32)
    rel32 = float(jnp.max(jnp.abs(out - ref32)) / (jnp.max(jnp.abs(ref32)) + 1e-6))
    assert rel32 < 1e-1, f"bf16 activation drift vs f32 chain too large: {rel32}"

    print("KERNEL_OK")
</pallas_src>

<mosaic_0001>
module attributes {stable_mosaic.version = 11 : i64} {
  func.func @_fa_chain_kernel(%arg0: i32, %arg1: i32, %arg2: memref<1x128x128xf32, #tpu.memory_space<vmem>>, %arg3: memref<5x128x128xbf16, #tpu.memory_space<vmem>>, %arg4: memref<5x128x1xf32, #tpu.memory_space<vmem>>, %arg5: memref<5x128x1xf32, #tpu.memory_space<vmem>>, %arg6: memref<1x128x128xf32, #tpu.memory_space<vmem>>, %arg7: memref<3x128x128xf32, #tpu.memory_space<vmem>>) attributes {dimension_semantics = [#tpu.dimension_semantics<parallel>, #tpu.dimension_semantics<parallel>], iteration_bounds = array<i64: 2, 2>, scalar_prefetch = 0 : i64, scratch_operands = 1 : i64, tpu.core_type = #tpu.core_type<tc>, window_params = [{transform_indices = @transform_0, window_bounds = array<i64: 1, 128, 128>}, {pipeline_mode = #tpu.pipeline_mode<synchronous>, transform_indices = @transform_1, window_bounds = array<i64: 5, 128, 128>}, {pipeline_mode = #tpu.pipeline_mode<synchronous>, transform_indices = @transform_2, window_bounds = array<i64: 5, 128, 1>}, {pipeline_mode = #tpu.pipeline_mode<synchronous>, transform_indices = @transform_3, window_bounds = array<i64: 5, 128, 1>}, {transform_indices = @transform_4, window_bounds = array<i64: 1, 128, 128>}]} {
    %c0 = arith.constant 0 : index
    %c0_0 = arith.constant 0 : index
    %c0_1 = arith.constant 0 : index
    %0 = vector.load %arg2[%c0, %c0_0, %c0_1] : memref<1x128x128xf32, #tpu.memory_space<vmem>>, vector<1x128x128xf32>
    %1 = vector.shape_cast %0 : vector<1x128x128xf32> to vector<128x128xf32>
    %2 = arith.truncf %1 : vector<128x128xf32> to vector<128x128xbf16>
    %c0_2 = arith.constant 0 : index
    %c0_3 = arith.constant 0 : index
    %c0_4 = arith.constant 0 : index
    %3 = vector.load %arg3[%c0_2, %c0_3, %c0_4] : memref<5x128x128xbf16, #tpu.memory_space<vmem>>, vector<1x128x128xbf16>
    %4 = vector.shape_cast %3 : vector<1x128x128xbf16> to vector<128x128xbf16>
    %cst = arith.constant dense<0.000000e+00> : vector<128x128xf32>
    %5 = tpu.matmul %4, %2, %cst {dimension_numbers = #tpu.dot_dimension_numbers<[1], [0], [0], [1], [0, 0, 1, 1], [], []>} : vector<128x128xbf16>, vector<128x128xbf16>, vector<128x128xf32> -> vector<128x128xf32>
    %c0_5 = arith.constant 0 : index
    %c0_6 = arith.constant 0 : index
    %c0_7 = arith.constant 0 : index
    %6 = vector.load %arg4[%c0_5, %c0_6, %c0_7] : memref<5x128x1xf32, #tpu.memory_space<vmem>>, vector<1x128x1xf32>
    %7 = vector.shape_cast %6 : vector<1x128x1xf32> to vector<128x1xf32>
    %8 = vector.broadcast %7 : vector<128x1xf32> to vector<128x128xf32>
    %9 = arith.mulf %5, %8 : vector<128x128xf32>
    %c0_8 = arith.constant 0 : index
    %c0_9 = arith.constant 0 : index
    %c0_10 = arith.constant 0 : index
    %10 = vector.load %arg5[%c0_8, %c0_9, %c0_10] : memref<5x128x1xf32, #tpu.memory_space<vmem>>, vector<1x128x1xf32>
    %11 = vector.shape_cast %10 : vector<1x128x1xf32> to vector<128x1xf32>
    %12 = vector.broadcast %11 : vector<128x1xf32> to vector<128x128xf32>
    %13 = arith.addf %9, %12 : vector<128x128xf32>
    %cst_11 = arith.constant 0.000000e+00 : f32
    %14 = vector.broadcast %cst_11 : f32 to vector<128x128xf32>
    %15 = arith.maximumf %13, %14 : vector<128x128xf32>
    %c0_12 = arith.constant 0 : index
    %c0_13 = arith.constant 0 : index
    %c0_14 = arith.constant 0 : index
    %16 = vector.load %arg7[%c0_12, %c0_13, %c0_14] : memref<3x128x128xf32, #tpu.memory_space<vmem>>, vector<1x128x128xf32>
    %17 = vector.shape_cast %16 : vector<1x128x128xf32> to vector<128x128xf32>
    %18 = vector.shape_cast %15 : vector<128x128xf32> to vector<1x128x128xf32>
    tpu.vector_store %arg7[%c0_12, %c0_13, %c0_14], %18 {strides = array<i32>} : memref<3x128x128xf32, #tpu.memory_space<vmem>>, vector<1x128x128xf32>,
    %19 = arith.truncf %15 : vector<128x128xf32> to vector<128x128xbf16>
    %c1 = arith.constant 1 : index
    %c0_15 = arith.constant 0 : index
    %c0_16 = arith.constant 0 : index
    %20 = vector.load %arg3[%c1, %c0_15, %c0_16] : memref<5x128x128xbf16, #tpu.memory_space<vmem>>, vector<1x128x128xbf16>
    %21 = vector.shape_cast %20 : vector<1x128x128xbf16> to vector<128x128xbf16>
    %cst_17 = arith.constant dense<0.000000e+00> : vector<128x128xf32>
    %22 = tpu.matmul %21, %19, %cst_17 {dimension_numbers = #tpu.dot_dimension_numbers<[1], [0], [0], [1], [0, 0, 1, 1], [], []>} : vector<128x128xbf16>, vector<128x128xbf16>, vector<128x128xf32> -> vector<128x128xf32>
    %c1_18 = arith.constant 1 : index
    %c0_19 = arith.constant 0 : index
    %c0_20 = arith.constant 0 : index
    %23 = vector.load %arg4[%c1_18, %c0_19, %c0_20] : memref<5x128x1xf32, #tpu.memory_space<vmem>>, vector<1x128x1xf32>
    %24 = vector.shape_cast %23 : vector<1x128x1xf32> to vector<128x1xf32>
    %25 = vector.broadcast %24 : vector<128x1xf32> to vector<128x128xf32>
    %26 = arith.mulf %22, %25 : vector<128x128xf32>
    %c1_21 = arith.constant 1 : index
    %c0_22 = arith.constant 0 : index
    %c0_23 = arith.constant 0 : index
    %27 = vector.load %arg5[%c1_21, %c0_22, %c0_23] : memref<5x128x1xf32, #tpu.memory_space<vmem>>, vector<1x128x1xf32>
    %28 = vector.shape_cast %27 : vector<1x128x1xf32> to vector<128x1xf32>
    %29 = vector.broadcast %28 : vector<128x1xf32> to vector<128x128xf32>
    %30 = arith.addf %26, %29 : vector<128x128xf32>
    %cst_24 = arith.constant 0.000000e+00 : f32
    %31 = vector.broadcast %cst_24 : f32 to vector<128x128xf32>
    %32 = arith.maximumf %30, %31 : vector<128x128xf32>
    %c1_25 = arith.constant 1 : index
    %c0_26 = arith.constant 0 : index
    %c0_27 = arith.constant 0 : index
    %33 = vector.load %arg7[%c1_25, %c0_26, %c0_27] : memref<3x128x128xf32, #tpu.memory_space<vmem>>, vector<1x128x128xf32>
    %34 = vector.shape_cast %33 : vector<1x128x128xf32> to vector<128x128xf32>
    %35 = vector.shape_cast %32 : vector<128x128xf32> to vector<1x128x128xf32>
    tpu.vector_store %arg7[%c1_25, %c0_26, %c0_27], %35 {strides = array<i32>} : memref<3x128x128xf32, #tpu.memory_space<vmem>>, vector<1x128x128xf32>,
    %36 = arith.truncf %32 : vector<128x128xf32> to vector<128x128xbf16>
    %c2 = arith.constant 2 : index
    %c0_28 = arith.constant 0 : index
    %c0_29 = arith.constant 0 : index
    %37 = vector.load %arg3[%c2, %c0_28, %c0_29] : memref<5x128x128xbf16, #tpu.memory_space<vmem>>, vector<1x128x128xbf16>
    %38 = vector.shape_cast %37 : vector<1x128x128xbf16> to vector<128x128xbf16>
    %cst_30 = arith.constant dense<0.000000e+00> : vector<128x128xf32>
    %39 = tpu.matmul %38, %36, %cst_30 {dimension_numbers = #tpu.dot_dimension_numbers<[1], [0], [0], [1], [0, 0, 1, 1], [], []>} : vector<128x128xbf16>, vector<128x128xbf16>, vector<128x128xf32> -> vector<128x128xf32>
    %c2_31 = arith.constant 2 : index
    %c0_32 = arith.constant 0 : index
    %c0_33 = arith.constant 0 : index
    %40 = vector.load %arg4[%c2_31, %c0_32, %c0_33] : memref<5x128x1xf32, #tpu.memory_space<vmem>>, vector<1x128x1xf32>
    %41 = vector.shape_cast %40 : vector<1x128x1xf32> to vector<128x1xf32>
    %42 = vector.broadcast %41 : vector<128x1xf32> to vector<128x128xf32>
    %43 = arith.mulf %39, %42 : vector<128x128xf32>
    %c2_34 = arith.constant 2 : index
    %c0_35 = arith.constant 0 : index
    %c0_36 = arith.constant 0 : index
    %44 = vector.load %arg5[%c2_34, %c0_35, %c0_36] : memref<5x128x1xf32, #tpu.memory_space<vmem>>, vector<1x128x1xf32>
    %45 = vector.shape_cast %44 : vector<1x128x1xf32> to vector<128x1xf32>
    %46 = vector.broadcast %45 : vector<128x1xf32> to vector<128x128xf32>
    %47 = arith.addf %43, %46 : vector<128x128xf32>
    %cst_37 = arith.constant 0.000000e+00 : f32
    %48 = vector.broadcast %cst_37 : f32 to vector<128x128xf32>
    %49 = arith.maximumf %47, %48 : vector<128x128xf32>
    %c0_38 = arith.constant 0 : index
    %c0_39 = arith.constant 0 : index
    %c0_40 = arith.constant 0 : index
    %50 = vector.load %arg7[%c0_38, %c0_39, %c0_40] : memref<3x128x128xf32, #tpu.memory_space<vmem>>, vector<1x128x128xf32>
    %51 = vector.shape_cast %50 : vector<1x128x128xf32> to vector<128x128xf32>
    %52 = arith.addf %49, %51 : vector<128x128xf32>
    %c2_41 = arith.constant 2 : index
    %c0_42 = arith.constant 0 : index
    %c0_43 = arith.constant 0 : index
    %53 = vector.load %arg7[%c2_41, %c0_42, %c0_43] : memref<3x128x128xf32, #tpu.memory_space<vmem>>, vector<1x128x128xf32>
    %54 = vector.shape_cast %53 : vector<1x128x128xf32> to vector<128x128xf32>
    %55 = vector.shape_cast %52 : vector<128x128xf32> to vector<1x128x128xf32>
    tpu.vector_store %arg7[%c2_41, %c0_42, %c0_43], %55 {strides = array<i32>} : memref<3x128x128xf32, #tpu.memory_space<vmem>>, vector<1x128x128xf32>,
    %56 = arith.truncf %52 : vector<128x128xf32> to vector<128x128xbf16>
    %c3 = arith.constant 3 : index
    %c0_44 = arith.constant 0 : index
    %c0_45 = arith.constant 0 : index
    %57 = vector.load %arg3[%c3, %c0_44, %c0_45] : memref<5x128x128xbf16, #tpu.memory_space<vmem>>, vector<1x128x128xbf16>
    %58 = vector.shape_cast %57 : vector<1x128x128xbf16> to vector<128x128xbf16>
    %cst_46 = arith.constant dense<0.000000e+00> : vector<128x128xf32>
    %59 = tpu.matmul %58, %56, %cst_46 {dimension_numbers = #tpu.dot_dimension_numbers<[1], [0], [0], [1], [0, 0, 1, 1], [], []>} : vector<128x128xbf16>, vector<128x128xbf16>, vector<128x128xf32> -> vector<128x128xf32>
    %c3_47 = arith.constant 3 : index
    %c0_48 = arith.constant 0 : index
    %c0_49 = arith.constant 0 : index
    %60 = vector.load %arg4[%c3_47, %c0_48, %c0_49] : memref<5x128x1xf32, #tpu.memory_space<vmem>>, vector<1x128x1xf32>
    %61 = vector.shape_cast %60 : vector<1x128x1xf32> to vector<128x1xf32>
    %62 = vector.broadcast %61 : vector<128x1xf32> to vector<128x128xf32>
    %63 = arith.mulf %59, %62 : vector<128x128xf32>
    %c3_50 = arith.constant 3 : index
    %c0_51 = arith.constant 0 : index
    %c0_52 = arith.constant 0 : index
    %64 = vector.load %arg5[%c3_50, %c0_51, %c0_52] : memref<5x128x1xf32, #tpu.memory_space<vmem>>, vector<1x128x1xf32>
    %65 = vector.shape_cast %64 : vector<1x128x1xf32> to vector<128x1xf32>
    %66 = vector.broadcast %65 : vector<128x1xf32> to vector<128x128xf32>
    %67 = arith.addf %63, %66 : vector<128x128xf32>
    %cst_53 = arith.constant 0.000000e+00 : f32
    %68 = vector.broadcast %cst_53 : f32 to vector<128x128xf32>
    %69 = arith.maximumf %67, %68 : vector<128x128xf32>
    %c1_54 = arith.constant 1 : index
    %c0_55 = arith.constant 0 : index
    %c0_56 = arith.constant 0 : index
    %70 = vector.load %arg7[%c1_54, %c0_55, %c0_56] : memref<3x128x128xf32, #tpu.memory_space<vmem>>, vector<1x128x128xf32>
    %71 = vector.shape_cast %70 : vector<1x128x128xf32> to vector<128x128xf32>
    %72 = arith.addf %69, %71 : vector<128x128xf32>
    %73 = arith.truncf %72 : vector<128x128xf32> to vector<128x128xbf16>
    %c4 = arith.constant 4 : index
    %c0_57 = arith.constant 0 : index
    %c0_58 = arith.constant 0 : index
    %74 = vector.load %arg3[%c4, %c0_57, %c0_58] : memref<5x128x128xbf16, #tpu.memory_space<vmem>>, vector<1x128x128xbf16>
    %75 = vector.shape_cast %74 : vector<1x128x128xbf16> to vector<128x128xbf16>
    %cst_59 = arith.constant dense<0.000000e+00> : vector<128x128xf32>
    %76 = tpu.matmul %75, %73, %cst_59 {dimension_numbers = #tpu.dot_dimension_numbers<[1], [0], [0], [1], [0, 0, 1, 1], [], []>} : vector<128x128xbf16>, vector<128x128xbf16>, vector<128x128xf32> -> vector<128x128xf32>
    %c4_60 = arith.constant 4 : index
    %c0_61 = arith.constant 0 : index
    %c0_62 = arith.constant 0 : index
    %77 = vector.load %arg4[%c4_60, %c0_61, %c0_62] : memref<5x128x1xf32, #tpu.memory_space<vmem>>, vector<1x128x1xf32>
    %78 = vector.shape_cast %77 : vector<1x128x1xf32> to vector<128x1xf32>
    %79 = vector.broadcast %78 : vector<128x1xf32> to vector<128x128xf32>
    %80 = arith.mulf %76, %79 : vector<128x128xf32>
    %c4_63 = arith.constant 4 : index
    %c0_64 = arith.constant 0 : index
    %c0_65 = arith.constant 0 : index
    %81 = vector.load %arg5[%c4_63, %c0_64, %c0_65] : memref<5x128x1xf32, #tpu.memory_space<vmem>>, vector<1x128x1xf32>
    %82 = vector.shape_cast %81 : vector<1x128x1xf32> to vector<128x1xf32>
    %83 = vector.broadcast %82 : vector<128x1xf32> to vector<128x128xf32>
    %84 = arith.addf %80, %83 : vector<128x128xf32>
    %cst_66 = arith.constant 0.000000e+00 : f32
    %85 = vector.broadcast %cst_66 : f32 to vector<128x128xf32>
    %86 = arith.maximumf %84, %85 : vector<128x128xf32>
    %c2_67 = arith.constant 2 : index
    %c0_68 = arith.constant 0 : index
    %c0_69 = arith.constant 0 : index
    %87 = vector.load %arg7[%c2_67, %c0_68, %c0_69] : memref<3x128x128xf32, #tpu.memory_space<vmem>>, vector<1x128x128xf32>
    %88 = vector.shape_cast %87 : vector<1x128x128xf32> to vector<128x128xf32>
    %89 = arith.addf %86, %88 : vector<128x128xf32>
    %c0_70 = arith.constant 0 : index
    %c0_71 = arith.constant 0 : index
    %c0_72 = arith.constant 0 : index
    %90 = vector.load %arg7[%c0_70, %c0_71, %c0_72] : memref<3x128x128xf32, #tpu.memory_space<vmem>>, vector<1x128x128xf32>
    %91 = vector.shape_cast %90 : vector<1x128x128xf32> to vector<128x128xf32>
    %92 = arith.addf %89, %91 : vector<128x128xf32>
    %c0_73 = arith.constant 0 : index
    %c0_74 = arith.constant 0 : index
    %c0_75 = arith.constant 0 : index
    %93 = vector.load %arg6[%c0_73, %c0_74, %c0_75] : memref<1x128x128xf32, #tpu.memory_space<vmem>>, vector<1x128x128xf32>
    %94 = vector.shape_cast %93 : vector<1x128x128xf32> to vector<128x128xf32>
    %95 = vector.shape_cast %92 : vector<128x128xf32> to vector<1x128x128xf32>
    tpu.vector_store %arg6[%c0_73, %c0_74, %c0_75], %95 {strides = array<i32>} : memref<1x128x128xf32, #tpu.memory_space<vmem>>, vector<1x128x128xf32>,
    return
  }
  func.func @transform_0(%arg0: i32, %arg1: i32) -> (i32, i32, i32) {
    %c0_i32 = arith.constant 0 : i32
    %c0_i32_0 = arith.constant 0 : i32
    return %arg0, %c0_i32, %arg1 : i32, i32, i32
  }
  func.func @transform_1(%arg0: i32, %arg1: i32) -> (i32, i32, i32) {
    %c0_i32 = arith.constant 0 : i32
    %c0_i32_0 = arith.constant 0 : i32
    %c0_i32_1 = arith.constant 0 : i32
    %c0_i32_2 = arith.constant 0 : i32
    return %c0_i32, %c0_i32_0, %c0_i32_1 : i32, i32, i32
  }
  func.func @transform_2(%arg0: i32, %arg1: i32) -> (i32, i32, i32) {
    %c0_i32 = arith.constant 0 : i32
    %c0_i32_0 = arith.constant 0 : i32
    %c0_i32_1 = arith.constant 0 : i32
    %c0_i32_2 = arith.constant 0 : i32
    return %c0_i32, %c0_i32_0, %c0_i32_1 : i32, i32, i32
  }
  func.func @transform_3(%arg0: i32, %arg1: i32) -> (i32, i32, i32) {
    %c0_i32 = arith.constant 0 : i32
    %c0_i32_0 = arith.constant 0 : i32
    %c0_i32_1 = arith.constant 0 : i32
    %c0_i32_2 = arith.constant 0 : i32
    return %c0_i32, %c0_i32_0, %c0_i32_1 : i32, i32, i32
  }
  func.func @transform_4(%arg0: i32, %arg1: i32) -> (i32, i32, i32) {
    %c0_i32 = arith.constant 0 : i32
    %c0_i32_0 = arith.constant 0 : i32
    return %arg0, %c0_i32, %arg1 : i32, i32, i32
  }
}

</mosaic_0001>

<llo_original>
// kernel: tpu_custom_call.1
$region0: #{tpu_custom_call.1}
  #allocation0 [shape = 'u32[]', space=smem, size = 0x4, offset = 0x4, fixed_abs, tag = 'smem constant byte address 0x4 - core index']
  #allocation1 [shape = 'u32[72,128]{1,0:T(1,128)}', space=vmem, size = 0x9000, scoped, tag = 'internal scratch']
  #allocation2 [shape = 'f32[3,128,128]{2,1,0:T(8,128)}', space=vmem, size = 0x30000, scoped, tag = 'scratch operand']
  %s0 = inlined_call_operand.vmem [shape: f32[2,128,256], index: 0, kind: input, shape index: {}]
  %s1 = inlined_call_operand.vmem [shape: bf16[5,128,128], index: 1, kind: input, shape index: {}]
  %s2 = inlined_call_operand.vmem [shape: f32[5,128,1], index: 2, kind: input, shape index: {}]
  %s3 = inlined_call_operand.vmem [shape: f32[5,128,1], index: 3, kind: input, shape index: {}]
  %s4 = inlined_call_operand.hbm [shape: f32[2,128,256], index: 4, kind: output, shape index: {}]
  %s5 = sld [smem:[#allocation0]]
  $region87: #{tpu_custom_call.1} parent=0
    _
  %s7 = ssub.s32 1, %s5
  %s8 = scalar_select 0, %s7, %s5
  $region1: #{tpu_custom_call.1} parent=0
    #allocation3 [shape = 'u8[131072]{0}', space=vmem, size = 0x20000, scoped, tag = 'input window, operand 0']
    #allocation4 [shape = 'u8[131072]{0}', space=vmem, size = 0x20000, scoped, tag = 'output window, operand 0']
    #allocation5 [shape = 's32[2]{0}', space=sflag, size = 0x8, scoped, tag = 'scoped memory for tpu_custom_call.1']
    %9 = vsyncpa [#allocation5], 0
    %s10 = scalar_lea.sflag [#allocation5], 1
    %11 = vsyncpa %s10, 0
    loop: start=0, step=1, limit=6
    $region2: #{tpu_custom_call.1} parent=1 // loop_pre_header
      _
    $region3: #{tpu_custom_call.1} parent=1 // loop_header
      %s13 = sphi 0, %s17
      %p14 = scmp.ge.s32.totalorder %s13, 6
      %s20 = sphi 0, %s32
      %s21 = sphi 0, %s28
      %s22 = sphi 0, %s20
      %s23 = sphi 0, %s21
      %s24 = sphi 0, %s22
      %s25 = sphi 0, %s23
      %s37 = sphi 0, %s39
      %s40 = sphi 0, %s37
      %s41 = sphi 0, %s40
      %s57 = sphi 0, %s41
      %s61 = sphi 0, %s61
      %s63 = sphi 0, %s61
      %s64 = sphi 0, %s63
      %s78 = sphi 0, %s64
      %s82 = sphi 0, %s82
      %s84 = sphi 0, %s82
      %s85 = sphi 0, %s84
      %s99 = sphi 0, %s85
      %s103 = sphi 0, %s103
      %s105 = sphi 0, %s103
      %s106 = sphi 0, %s105
      %s120 = sphi 0, %s106
      %s128 = sphi 0, %s130
      %s131 = sphi 0, %s128
      %s132 = sphi 0, %s131
      %s148 = sphi 0, %s132
    $region4: #{tpu_custom_call.1} parent=1 // loop_header_branch
      %16 = sbr.rel (%p14) target = $region8
    $region5: #{tpu_custom_call.1} parent=1 // loop_body
      %s18 = ssub.s32 %s13, 1
      %s19 = ssub.s32 %s13, 2
      %s26 = sadd.s32 1, %s21
      %p27 = scmp.ge.s32.totalorder %s26, 2
      %s28 = scalar_select %p27, 0, %s26
      %s29 = sadd.s32 1, %s20
      %s30 = scalar_select %p27, %s29, %s20
      %p31 = scmp.ge.s32.totalorder %s30, 2
      %s32 = scalar_select %p31, 0, %s30
      %s33 = ssub.s32 %s20, %s32
      %s34 = ssub.s32 %s21, %s28
      %s35 = sor.u32 %s33, %s34
      %p36 = scmp.eq.s32.totalorder %s35, 0
      %s38 = sadd.s32 %s37, 1
      %s39 = scalar_select %p36, %s37, %s38
      %p42 = pneg %p36
      %p43 = scmp.eq.s32.totalorder %s13, 3
      %p44 = por %p42, %p43
      %p45 = scmp.ne.s32.totalorder %s37, %s40
      %p46 = scmp.eq.s32.totalorder %s13, 0
      %p47 = por %p45, %p46
      %p48 = scmp.ne.s32.totalorder %s37, %s40
      %p49 = scmp.eq.s32.totalorder %s18, 3
      %p50 = por %p48, %p49
      %p51 = scmp.ne.s32.totalorder %s40, %s41
      %p52 = scmp.eq.s32.totalorder %s18, 0
      %p53 = por %p51, %p52
      %p54 = scmp.ne.s32.totalorder %s40, %s41
      %p55 = scmp.eq.s32.totalorder %s19, 3
      %p56 = por %p54, %p55
      %p58 = scmp.ne.s32.totalorder %s41, %s57
      %p59 = scmp.eq.s32.totalorder %s19, 0
      %p60 = por %p58, %p59
      %s62 = sadd.s32 %s61, 1
      %p65 = scmp.eq.s32.totalorder %s13, 3
      %p66 = scmp.ne.s32.totalorder %s61, %s63
      %p67 = scmp.eq.s32.totalorder %s13, 0
      %p68 = por %p66, %p67
      %p69 = scmp.ne.s32.totalorder %s61, %s63
      %p70 = scmp.eq.s32.totalorder %s18, 3
      %p71 = por %p69, %p70
      %p72 = scmp.ne.s32.totalorder %s63, %s64
      %p73 = scmp.eq.s32.totalorder %s18, 0
      %p74 = por %p72, %p73
      %p75 = scmp.ne.s32.totalorder %s63, %s64
      %p76 = scmp.eq.s32.totalorder %s19, 3
      %p77 = por %p75, %p76
      %p79 = scmp.ne.s32.totalorder %s64, %s78
      %p80 = scmp.eq.s32.totalorder %s19, 0
      %p81 = por %p79, %p80
      %s83 = sadd.s32 %s82, 1
      %p86 = scmp.eq.s32.totalorder %s13, 3
      %p87 = scmp.ne.s32.totalorder %s82, %s84
      %p88 = scmp.eq.s32.totalorder %s13, 0
      %p89 = por %p87, %p88
      %p90 = scmp.ne.s32.totalorder %s82, %s84
      %p91 = scmp.eq.s32.totalorder %s18, 3
      %p92 = por %p90, %p91
      %p93 = scmp.ne.s32.totalorder %s84, %s85
      %p94 = scmp.eq.s32.totalorder %s18, 0
      %p95 = por %p93, %p94
      %p96 = scmp.ne.s32.totalorder %s84, %s85
      %p97 = scmp.eq.s32.totalorder %s19, 3
      %p98 = por %p96, %p97
      %p100 = scmp.ne.s32.totalorder %s85, %s99
      %p101 = scmp.eq.s32.totalorder %s19, 0
      %p102 = por %p100, %p101
      %s104 = sadd.s32 %s103, 1
      %p107 = scmp.eq.s32.totalorder %s13, 3
      %p108 = scmp.ne.s32.totalorder %s103, %s105
      %p109 = scmp.eq.s32.totalorder %s13, 0
      %p110 = por %p108, %p109
      %p111 = scmp.ne.s32.totalorder %s103, %s105
      %p112 = scmp.eq.s32.totalorder %s18, 3
      %p113 = por %p111, %p112
      %p114 = scmp.ne.s32.totalorder %s105, %s106
      %p115 = scmp.eq.s32.totalorder %s18, 0
      %p116 = por %p114, %p115
      %p117 = scmp.ne.s32.totalorder %s105, %s106
      %p118 = scmp.eq.s32.totalorder %s19, 3
      %p119 = por %p117, %p118
      %p121 = scmp.ne.s32.totalorder %s106, %s120
      %p122 = scmp.eq.s32.totalorder %s19, 0
      %p123 = por %p121, %p122
      %s124 = ssub.s32 %s20, %s32
      %s125 = ssub.s32 %s21, %s28
      %s126 = sor.u32 %s124, %s125
      %p127 = scmp.eq.s32.totalorder %s126, 0
      %s129 = sadd.s32 %s128, 1
      %s130 = scalar_select %p127, %s128, %s129
      %p133 = pneg %p127
      %p134 = scmp.eq.s32.totalorder %s13, 3
      %p135 = por %p133, %p134
      %p136 = scmp.ne.s32.totalorder %s128, %s131
      %p137 = scmp.eq.s32.totalorder %s13, 0
      %p138 = por %p136, %p137
      %p139 = scmp.ne.s32.totalorder %s128, %s131
      %p140 = scmp.eq.s32.totalorder %s18, 3
      %p141 = por %p139, %p140
      %p142 = scmp.ne.s32.totalorder %s131, %s132
      %p143 = scmp.eq.s32.totalorder %s18, 0
      %p144 = por %p142, %p143
      %p145 = scmp.ne.s32.totalorder %s131, %s132
      %p146 = scmp.eq.s32.totalorder %s19, 3
      %p147 = por %p145, %p146
      %p149 = scmp.ne.s32.totalorder %s132, %s148
      %p150 = scmp.eq.s32.totalorder %s19, 0
      %p151 = por %p149, %p150
      %p152 = scmp.le.s32.totalorder 1, %s13
      %p153 = scmp.lt.s32.totalorder %s13, 5
      %p154 = pnand %p152, %p153
      %p155 = pneg %p154
      // Predicated region
      $region9: #{tpu_custom_call.1} parent=5 // pred_check
        _
      $region10: #{tpu_custom_call.1} parent=5 // pred_check_branch
        %157 = sbr.rel (%p154) target = $region12
      $region11: #{tpu_custom_call.1} parent=5 // pred_region
        %s158 = ssub.s32 %s13, 1
        // Predicated region
        $region13: #{tpu_custom_call.1} parent=11 // pred_check
          %p159 = pneg %p74
        $region14: #{tpu_custom_call.1} parent=11 // pred_check_branch
          %161 = sbr.rel (%p159) target = $region16
        $region15: #{tpu_custom_call.1} parent=11 // pred_region
          _
        $region16: #{tpu_custom_call.1} parent=11 // pred_fallthru
          _
        // Predicated region
        $region17: #{tpu_custom_call.1} parent=11 // pred_check
          %p162 = pneg %p95
        $region18: #{tpu_custom_call.1} parent=11 // pred_check_branch
          %164 = sbr.rel (%p162) target = $region20
        $region19: #{tpu_custom_call.1} parent=11 // pred_region
          _
        $region20: #{tpu_custom_call.1} parent=11 // pred_fallthru
          _
        // Predicated region
        $region21: #{tpu_custom_call.1} parent=11 // pred_check
          %p165 = pneg %p116
        $region22: #{tpu_custom_call.1} parent=11 // pred_check_branch
          %167 = sbr.rel (%p165) target = $region24
        $region23: #{tpu_custom_call.1} parent=11 // pred_region
          _
        $region24: #{tpu_custom_call.1} parent=11 // pred_fallthru
          _
      $region12: #{tpu_custom_call.1} parent=5 // pred_fallthru
        _
      %p168 = scmp.lt.s32.totalorder %s13, 4
      // Predicated region
      $region25: #{tpu_custom_call.1} parent=5 // pred_check
        %p169 = pneg %p168
      $region26: #{tpu_custom_call.1} parent=5 // pred_check_branch
        %171 = sbr.rel (%p169) target = $region28
      $region27: #{tpu_custom_call.1} parent=5 // pred_region
        // Predicated region
        $region29: #{tpu_custom_call.1} parent=27 // pred_check
          %p172 = pneg %p47
        $region30: #{tpu_custom_call.1} parent=27 // pred_check_branch
          %174 = sbr.rel (%p172) target = $region32
        $region31: #{tpu_custom_call.1} parent=27 // pred_region
          %s175 = sand.u32 %s37, 1
          %s176 = sand.u32 %s37, 1
          %s177 = smul.addr %s176, 128
          %s178 = scalar_lea.vmem [#allocation3], %s177
          %s179 = smul.addr %s20, 32
          %s180 = sadd.s32 %s21, %s179
          %s181 = smul.addr %s180, 8
          %s182 = scalar_lea.vmem %s0, %s181
          // Predicated region
          $region33: #{tpu_custom_call.1} parent=31 // pred_check
            _
          $region34: #{tpu_custom_call.1} parent=31 // pred_check_branch
            %184 = sbr.rel (0) target = $region36
          $region35: #{tpu_custom_call.1} parent=31 // pred_region
            // Predicated region
            $region37: #{tpu_custom_call.1} parent=35 // pred_check
              _
            $region38: #{tpu_custom_call.1} parent=35 // pred_check_branch
              %186 = sbr.rel (0) target = $region40
            $region39: #{tpu_custom_call.1} parent=35 // pred_region
              // Predicated region
              $region52: #{tpu_custom_call.1} parent=39 // pred_check
                _
              $region53: #{tpu_custom_call.1} parent=39 // pred_check_branch
                %232 = sbr.rel (0) target = $region55
              $region54: #{tpu_custom_call.1} parent=39 // pred_region
                loop: start=0, step=1, limit=1
                $region56: #{tpu_custom_call.1} parent=54 // loop_pre_header
                  _
                $region57: #{tpu_custom_call.1} parent=54 // loop_header
                  %s234 = sphi 0, %s238
                  %p235 = scmp.ge.s32.totalorder %s234, 1
                  %s239 = sphi %s182, %s182
                  %s240 = sphi %s178, %s178
                $region58: #{tpu_custom_call.1} parent=54 // loop_header_branch
                  %237 = sbr.rel (%p235) target = $region62
                $region59: #{tpu_custom_call.1} parent=54 // loop_body
                  %v241 = vld [vmem:[%s239] sm:$0xff]
                  %242 = vst [vmem:[%s240] sm:$0xff] %v241
                  %v243 = vld [vmem:[%s239 + $0x10] sm:$0xff]
                  %244 = vst [vmem:[%s240 + $0x8] sm:$0xff] %v243
                  %v245 = vld [vmem:[%s239 + $0x20] sm:$0xff]
                  %246 = vst [vmem:[%s240 + $0x10] sm:$0xff] %v245
                  %v247 = vld [vmem:[%s239 + $0x30] sm:$0xff]
                  %248 = vst [vmem:[%s240 + $0x18] sm:$0xff] %v247
                  %v249 = vld [vmem:[%s239 + $0x40] sm:$0xff]
                  %250 = vst [vmem:[%s240 + $0x20] sm:$0xff] %v249
                  %v251 = vld [vmem:[%s239 + $0x50] sm:$0xff]
                  %252 = vst [vmem:[%s240 + $0x28] sm:$0xff] %v251
                  %v253 = vld [vmem:[%s239 + $0x60] sm:$0xff]
                  %254 = vst [vmem:[%s240 + $0x30] sm:$0xff] %v253
                  %v255 = vld [vmem:[%s239 + $0x70] sm:$0xff]
                  %256 = vst [vmem:[%s240 + $0x38] sm:$0xff] %v255
                  %v257 = vld [vmem:[%s239 + $0x80] sm:$0xff]
                  %258 = vst [vmem:[%s240 + $0x40] sm:$0xff] %v257
                  %v259 = vld [vmem:[%s239 + $0x90] sm:$0xff]
                  %260 = vst [vmem:[%s240 + $0x48] sm:$0xff] %v259
                  %v261 = vld [vmem:[%s239 + $0xa0] sm:$0xff]
                  %262 = vst [vmem:[%s240 + $0x50] sm:$0xff] %v261
                  %v263 = vld [vmem:[%s239 + $0xb0] sm:$0xff]
                  %264 = vst [vmem:[%s240 + $0x58] sm:$0xff] %v263
                  %v265 = vld [vmem:[%s239 + $0xc0] sm:$0xff]
                  %266 = vst [vmem:[%s240 + $0x60] sm:$0xff] %v265
                  %v267 = vld [vmem:[%s239 + $0xd0] sm:$0xff]
                  %268 = vst [vmem:[%s240 + $0x68] sm:$0xff] %v267
                  %v269 = vld [vmem:[%s239 + $0xe0] sm:$0xff]
                  %270 = vst [vmem:[%s240 + $0x70] sm:$0xff] %v269
                  %v271 = vld [vmem:[%s239 + $0xf0] sm:$0xff]
                  %272 = vst [vmem:[%s240 + $0x78] sm:$0xff] %v271
                $region60: #{tpu_custom_call.1} parent=54 // loop_footer
                  %s238 = sadd.s32 1, %s234
                $region61: #{tpu_custom_call.1} parent=54 // loop_footer_branch
                  %233 = sbr.rel target = $region57
                $region62: #{tpu_custom_call.1} parent=54 // loop_exit
                  _
              $region55: #{tpu_custom_call.1} parent=39 // pred_fallthru
                _
              // Predicated region
              $region63: #{tpu_custom_call.1} parent=39 // pred_check
                _
              $region64: #{tpu_custom_call.1} parent=39 // pred_check_branch
                %274 = sbr.rel target = $region66
              $region65: #{tpu_custom_call.1} parent=39 // pred_region
                _
              $region66: #{tpu_custom_call.1} parent=39 // pred_fallthru
                _
            $region40: #{tpu_custom_call.1} parent=35 // pred_fallthru
              _
            // Predicated region
            $region41: #{tpu_custom_call.1} parent=35 // pred_check
              _
            $region42: #{tpu_custom_call.1} parent=35 // pred_check_branch
              %188 = sbr.rel target = $region44
            $region43: #{tpu_custom_call.1} parent=35 // pred_region
              %s190 = ssub.s32 256, 1
              loop: start=0, step=1, limit=1
              $region45: #{tpu_custom_call.1} parent=43 // loop_pre_header
                _
              $region46: #{tpu_custom_call.1} parent=43 // loop_header
                %s192 = sphi 0, %s196
                %p193 = scmp.ge.s32.totalorder %s192, 1
                %s197 = sphi %s182, %s182
                %s198 = sphi %s178, %s178
              $region47: #{tpu_custom_call.1} parent=43 // loop_header_branch
                %195 = sbr.rel (%p193) target = $region51
              $region48: #{tpu_custom_call.1} parent=43 // loop_body
                %v199 = vld [vmem:[%s197] sm:%s190]
                %200 = vst [vmem:[%s198] sm:%s190] %v199
                %v201 = vld [vmem:[%s197 + $0x10] sm:%s190]
                %202 = vst [vmem:[%s198 + $0x8] sm:%s190] %v201
                %v203 = vld [vmem:[%s197 + $0x20] sm:%s190]
                %204 = vst [vmem:[%s198 + $0x10] sm:%s190] %v203
                %v205 = vld [vmem:[%s197 + $0x30] sm:%s190]
                %206 = vst [vmem:[%s198 + $0x18] sm:%s190] %v205
                %v207 = vld [vmem:[%s197 + $0x40] sm:%s190]
                %208 = vst [vmem:[%s198 + $0x20] sm:%s190] %v207
                %v209 = vld [vmem:[%s197 + $0x50] sm:%s190]
                %210 = vst [vmem:[%s198 + $0x28] sm:%s190] %v209
                %v211 = vld [vmem:[%s197 + $0x60] sm:%s190]
                %212 = vst [vmem:[%s198 + $0x30] sm:%s190] %v211
                %v213 = vld [vmem:[%s197 + $0x70] sm:%s190]
                %214 = vst [vmem:[%s198 + $0x38] sm:%s190] %v213
                %v215 = vld [vmem:[%s197 + $0x80] sm:%s190]
                %216 = vst [vmem:[%s198 + $0x40] sm:%s190] %v215
                %v217 = vld [vmem:[%s197 + $0x90] sm:%s190]
                %218 = vst [vmem:[%s198 + $0x48] sm:%s190] %v217
                %v219 = vld [vmem:[%s197 + $0xa0] sm:%s190]
                %220 = vst [vmem:[%s198 + $0x50] sm:%s190] %v219
                %v221 = vld [vmem:[%s197 + $0xb0] sm:%s190]
                %222 = vst [vmem:[%s198 + $0x58] sm:%s190] %v221
                %v223 = vld [vmem:[%s197 + $0xc0] sm:%s190]
                %224 = vst [vmem:[%s198 + $0x60] sm:%s190] %v223
                %v225 = vld [vmem:[%s197 + $0xd0] sm:%s190]
                %226 = vst [vmem:[%s198 + $0x68] sm:%s190] %v225
                %v227 = vld [vmem:[%s197 + $0xe0] sm:%s190]
                %228 = vst [vmem:[%s198 + $0x70] sm:%s190] %v227
                %v229 = vld [vmem:[%s197 + $0xf0] sm:%s190]
                %230 = vst [vmem:[%s198 + $0x78] sm:%s190] %v229
              $region49: #{tpu_custom_call.1} parent=43 // loop_footer
                %s196 = sadd.s32 1, %s192
              $region50: #{tpu_custom_call.1} parent=43 // loop_footer_branch
                %191 = sbr.rel target = $region46
              $region51: #{tpu_custom_call.1} parent=43 // loop_exit
                _
            $region44: #{tpu_custom_call.1} parent=35 // pred_fallthru
              _
          $region36: #{tpu_custom_call.1} parent=31 // pred_fallthru
            _
          %275 = vnop
        $region32: #{tpu_custom_call.1} parent=27 // pred_fallthru
          _
      $region28: #{tpu_custom_call.1} parent=5 // pred_fallthru
        _
      %p276 = scmp.le.s32.totalorder 1, %s13
      %p277 = scmp.lt.s32.totalorder %s13, 5
      %p278 = pnand %p276, %p277
      %p279 = pneg %p278
      // Predicated region
      $region67: #{tpu_custom_call.1} parent=5 // pred_check
        _
      $region68: #{tpu_custom_call.1} parent=5 // pred_check_branch
        %281 = sbr.rel (%p278) target = $region70
      $region69: #{tpu_custom_call.1} parent=5 // pred_region
        %s282 = ssub.s32 %s13, 1
        %s283 = sand.u32 %s40, 1
        %s284 = sand.u32 %s40, 1
        %s285 = smul.addr %s284, 128
        %s286 = scalar_lea.vmem [#allocation3], %s285
        // Predicated region
        $region71: #{tpu_custom_call.1} parent=69 // pred_check
          %p287 = pneg %p53
        $region72: #{tpu_custom_call.1} parent=69 // pred_check_branch
          %289 = sbr.rel (%p287) target = $region74
        $region73: #{tpu_custom_call.1} parent=69 // pred_region
          _
        $region74: #{tpu_custom_call.1} parent=69 // pred_fallthru
          _
        %s290 = sand.u32 %s40, 1
        %s291 = sand.u32 %s40, 1
        %s292 = smul.addr %s291, 128
        %s293 = scalar_lea.vmem [#allocation3], %s292
        %p294 = pneg %p53
        %p295 = pneg %p50
        %p296 = pneg %p74
        %p297 = pneg %p71
        %p298 = pneg %p95
        %p299 = pneg %p92
        %p300 = pneg %p116
        %p301 = pneg %p113
        %p302 = pneg %p144
        %p303 = pneg %p141
        %s304 = sand.u32 %s131, 1
        %s305 = scalar_lea.sflag [#allocation5], %s304
        %s306 = sand.u32 %s131, 1
        %s307 = smul.addr %s306, 128
        %s308 = scalar_lea.vmem [#allocation4], %s307
        %v309 = vld [vmem:[%s286] sm:$0xff]
        %v310 = vld [vmem:[%s286 + $0x8] sm:$0xff]
        %v311 = vld [vmem:[%s286 + $0x10] sm:$0xff]
        %v312 = vld [vmem:[%s286 + $0x18] sm:$0xff]
        %v313 = vld [vmem:[%s286 + $0x20] sm:$0xff]
        %v314 = vld [vmem:[%s286 + $0x28] sm:$0xff]
        %v315 = vld [vmem:[%s286 + $0x30] sm:$0xff]
        %v316 = vld [vmem:[%s286 + $0x38] sm:$0xff]
        %v317 = vld [vmem:[%s286 + $0x40] sm:$0xff]
        %v318 = vld [vmem:[%s286 + $0x48] sm:$0xff]
        %v319 = vld [vmem:[%s286 + $0x50] sm:$0xff]
        %v320 = vld [vmem:[%s286 + $0x58] sm:$0xff]
        %v321 = vld [vmem:[%s286 + $0x60] sm:$0xff]
        %v322 = vld [vmem:[%s286 + $0x68] sm:$0xff]
        %v323 = vld [vmem:[%s286 + $0x70] sm:$0xff]
        %v324 = vld [vmem:[%s286 + $0x78] sm:$0xff]
        %v325 = vpack.c.bf16 %v310, %v309
        %v326 = vpack.c.bf16 %v312, %v311
        %v327 = vpack.c.bf16 %v314, %v313
        %v328 = vpack.c.bf16 %v316, %v315
        %v329 = vpack.c.bf16 %v318, %v317
        %v330 = vpack.c.bf16 %v320, %v319
        %v331 = vpack.c.bf16 %v322, %v321
        %v332 = vpack.c.bf16 %v324, %v323
        %v333 = vld [vmem:[%s1] sm:$0xf]
        %v334 = vld [vmem:[%s1 + $0x4] sm:$0xf]
        %v335 = vld [vmem:[%s1 + $0x8] sm:$0xf]
        %v336 = vld [vmem:[%s1 + $0xc] sm:$0xf]
        %v337 = vld [vmem:[%s1 + $0x10] sm:$0xf]
        %v338 = vld [vmem:[%s1 + $0x14] sm:$0xf]
        %v339 = vld [vmem:[%s1 + $0x18] sm:$0xf]
        %v340 = vld [vmem:[%s1 + $0x1c] sm:$0xf]
        %v341 = vld [vmem:[%s1 + $0x20] sm:$0xf]
        %v342 = vld [vmem:[%s1 + $0x24] sm:$0xf]
        %v343 = vld [vmem:[%s1 + $0x28] sm:$0xf]
        %v344 = vld [vmem:[%s1 + $0x2c] sm:$0xf]
        %v345 = vld [vmem:[%s1 + $0x30] sm:$0xf]
        %v346 = vld [vmem:[%s1 + $0x34] sm:$0xf]
        %v347 = vld [vmem:[%s1 + $0x38] sm:$0xf]
        %v348 = vld [vmem:[%s1 + $0x3c] sm:$0xf]
        %v365 = vunpack.c.l.b16 %v333
        %v366 = vunpack.c.l.b16 %v334
        %v367 = vunpack.c.l.b16 %v335
        %v368 = vunpack.c.l.b16 %v336
        %v369 = vunpack.c.l.b16 %v337
        %v370 = vunpack.c.l.b16 %v338
        %v371 = vunpack.c.l.b16 %v339
        %v372 = vunpack.c.l.b16 %v340
        %v373 = vunpack.c.l.b16 %v341
        %v374 = vunpack.c.l.b16 %v342
        %v375 = vunpack.c.l.b16 %v343
        %v376 = vunpack.c.l.b16 %v344
        %v377 = vunpack.c.l.b16 %v345
        %v378 = vunpack.c.l.b16 %v346
        %v379 = vunpack.c.l.b16 %v347
        %v380 = vunpack.c.l.b16 %v348
        %v381 = vpack.c.b16 %v366, %v365
        %v382 = vpack.c.b16 %v368, %v367
        %v383 = vpack.c.b16 %v370, %v369
        %v384 = vpack.c.b16 %v372, %v371
        %v385 = vpack.c.b16 %v374, %v373
        %v386 = vpack.c.b16 %v376, %v375
        %v387 = vpack.c.b16 %v378, %v377
        %v388 = vpack.c.b16 %v380, %v379
        %397 = vmatpush.bf16.msra.mxu0 %v332
        %398 = vmatpush.bf16.msra.mxu0 %v331
        %399 = vmatpush.bf16.msra.mxu0 %v330
        %400 = vmatpush.bf16.msra.mxu0 %v329
        %401 = vmatpush.bf16.msra.mxu0 %v328
        %402 = vmatpush.bf16.msra.mxu0 %v327
        %403 = vmatpush.bf16.msra.mxu0 %v326
        %404 = vmatpush.bf16.msra.mxu0 %v325
        %405 = vmatmul.bf16.gmra.mxu0 %v381
        %v406 = vpop.f32.mrf.mxu0
        %v407 = vadd.f32 0.0, %v406
        %v408 = vpop.f32.mrf.mxu0
        %v409 = vadd.f32 0.0, %v408
        %410 = vmatmul.bf16.gmra.mxu0 %v382
        %v411 = vpop.f32.mrf.mxu0
        %v412 = vadd.f32 0.0, %v411
        %v413 = vpop.f32.mrf.mxu0
        %v414 = vadd.f32 0.0, %v413
        %415 = vmatmul.bf16.gmra.mxu0 %v383
        %v416 = vpop.f32.mrf.mxu0
        %v417 = vadd.f32 0.0, %v416
        %v418 = vpop.f32.mrf.mxu0
        %v419 = vadd.f32 0.0, %v418
        %420 = vmatmul.bf16.gmra.mxu0 %v384
        %v421 = vpop.f32.mrf.mxu0
        %v422 = vadd.f32 0.0, %v421
        %v423 = vpop.f32.mrf.mxu0
        %v424 = vadd.f32 0.0, %v423
        %425 = vmatmul.bf16.gmra.mxu0 %v385
        %v426 = vpop.f32.mrf.mxu0
        %v427 = vadd.f32 0.0, %v426
        %v428 = vpop.f32.mrf.mxu0
        %v429 = vadd.f32 0.0, %v428
        %430 = vmatmul.bf16.gmra.mxu0 %v386
        %v431 = vpop.f32.mrf.mxu0
        %v432 = vadd.f32 0.0, %v431
        %v433 = vpop.f32.mrf.mxu0
        %v434 = vadd.f32 0.0, %v433
        %435 = vmatmul.bf16.gmra.mxu0 %v387
        %v436 = vpop.f32.mrf.mxu0
        %v437 = vadd.f32 0.0, %v436
        %v438 = vpop.f32.mrf.mxu0
        %v439 = vadd.f32 0.0, %v438
        %440 = vmatmul.bf16.gmra.mxu0 %v388
        %v441 = vpop.f32.mrf.mxu0
        %v442 = vadd.f32 0.0, %v441
        %v443 = vpop.f32.mrf.mxu0
        %v444 = vadd.f32 0.0, %v443
        %445 = vdwg.mxu0
        %v446 = vld [vmem:[%s2] sm:$0xff]
        %v447 = vld [vmem:[%s2 + $0x8] sm:$0xff]
        %v448 = vld [vmem:[%s2 + $0x10] sm:$0xff]
        %v449 = vld [vmem:[%s2 + $0x18] sm:$0xff]
        %v450 = vld [vmem:[%s2 + $0x20] sm:$0xff]
        %v451 = vld [vmem:[%s2 + $0x28] sm:$0xff]
        %v452 = vld [vmem:[%s2 + $0x30] sm:$0xff]
        %v453 = vld [vmem:[%s2 + $0x38] sm:$0xff]
        %v454 = vld [vmem:[%s2 + $0x40] sm:$0xff]
        %v455 = vld [vmem:[%s2 + $0x48] sm:$0xff]
        %v456 = vld [vmem:[%s2 + $0x50] sm:$0xff]
        %v457 = vld [vmem:[%s2 + $0x58] sm:$0xff]
        %v458 = vld [vmem:[%s2 + $0x60] sm:$0xff]
        %v459 = vld [vmem:[%s2 + $0x68] sm:$0xff]
        %v460 = vld [vmem:[%s2 + $0x70] sm:$0xff]
        %v461 = vld [vmem:[%s2 + $0x78] sm:$0xff]
        %463 = vset.pattern.permute.xlu0 0
        %464 = vperm.xlu0 %463, %v446
        %v465 = vpop.permute.xlu0 %464
        %468 = vset.pattern.permute.xlu0 0
        %469 = vperm.xlu0 %468, %v447
        %v470 = vpop.permute.xlu0 %469
        %473 = vset.pattern.permute.xlu0 0
        %474 = vperm.xlu0 %473, %v448
        %v475 = vpop.permute.xlu0 %474
        %478 = vset.pattern.permute.xlu0 0
        %479 = vperm.xlu0 %478, %v449
        %v480 = vpop.permute.xlu0 %479
        %483 = vset.pattern.permute.xlu0 0
        %484 = vperm.xlu0 %483, %v450
        %v485 = vpop.permute.xlu0 %484
        %488 = vset.pattern.permute.xlu0 0
        %489 = vperm.xlu0 %488, %v451
        %v490 = vpop.permute.xlu0 %489
        %493 = vset.pattern.permute.xlu0 0
        %494 = vperm.xlu0 %493, %v452
        %v495 = vpop.permute.xlu0 %494
        %498 = vset.pattern.permute.xlu0 0
        %499 = vperm.xlu0 %498, %v453
        %v500 = vpop.permute.xlu0 %499
        %503 = vset.pattern.permute.xlu0 0
        %504 = vperm.xlu0 %503, %v454
        %v505 = vpop.permute.xlu0 %504
        %508 = vset.pattern.permute.xlu0 0
        %509 = vperm.xlu0 %508, %v455
        %v510 = vpop.permute.xlu0 %509
        %513 = vset.pattern.permute.xlu0 0
        %514 = vperm.xlu0 %513, %v456
        %v515 = vpop.permute.xlu0 %514
        %518 = vset.pattern.permute.xlu0 0
        %519 = vperm.xlu0 %518, %v457
        %v520 = vpop.permute.xlu0 %519
        %523 = vset.pattern.permute.xlu0 0
        %524 = vperm.xlu0 %523, %v458
        %v525 = vpop.permute.xlu0 %524
        %528 = vset.pattern.permute.xlu0 0
        %529 = vperm.xlu0 %528, %v459
        %v530 = vpop.permute.xlu0 %529
        %533 = vset.pattern.permute.xlu0 0
        %534 = vperm.xlu0 %533, %v460
        %v535 = vpop.permute.xlu0 %534
        %538 = vset.pattern.permute.xlu0 0
        %539 = vperm.xlu0 %538, %v461
        %v540 = vpop.permute.xlu0 %539
        %v542 = vmul.f32 %v407, %v465
        %v543 = vmul.f32 %v409, %v470
        %v544 = vmul.f32 %v412, %v475
        %v545 = vmul.f32 %v414, %v480
        %v546 = vmul.f32 %v417, %v485
        %v547 = vmul.f32 %v419, %v490
        %v548 = vmul.f32 %v422, %v495
        %v549 = vmul.f32 %v424, %v500
        %v550 = vmul.f32 %v427, %v505
        %v551 = vmul.f32 %v429, %v510
        %v552 = vmul.f32 %v432, %v515
        %v553 = vmul.f32 %v434, %v520
        %v554 = vmul.f32 %v437, %v525
        %v555 = vmul.f32 %v439, %v530
        %v556 = vmul.f32 %v442, %v535
        %v557 = vmul.f32 %v444, %v540
        %v558 = vld [vmem:[%s3] sm:$0xff]
        %v559 = vld [vmem:[%s3 + $0x8] sm:$0xff]
        %v560 = vld [vmem:[%s3 + $0x10] sm:$0xff]
        %v561 = vld [vmem:[%s3 + $0x18] sm:$0xff]
        %v562 = vld [vmem:[%s3 + $0x20] sm:$0xff]
        %v563 = vld [vmem:[%s3 + $0x28] sm:$0xff]
        %v564 = vld [vmem:[%s3 + $0x30] sm:$0xff]
        %v565 = vld [vmem:[%s3 + $0x38] sm:$0xff]
        %v566 = vld [vmem:[%s3 + $0x40] sm:$0xff]
        %v567 = vld [vmem:[%s3 + $0x48] sm:$0xff]
        %v568 = vld [vmem:[%s3 + $0x50] sm:$0xff]
        %v569 = vld [vmem:[%s3 + $0x58] sm:$0xff]
        %v570 = vld [vmem:[%s3 + $0x60] sm:$0xff]
        %v571 = vld [vmem:[%s3 + $0x68] sm:$0xff]
        %v572 = vld [vmem:[%s3 + $0x70] sm:$0xff]
        %v573 = vld [vmem:[%s3 + $0x78] sm:$0xff]
        %575 = vset.pattern.permute.xlu0 0
        %576 = vperm.xlu0 %575, %v558
        %v577 = vpop.permute.xlu0 %576
        %580 = vset.pattern.permute.xlu0 0
        %581 = vperm.xlu0 %580, %v559
        %v582 = vpop.permute.xlu0 %581
        %585 = vset.pattern.permute.xlu0 0
        %586 = vperm.xlu0 %585, %v560
        %v587 = vpop.permute.xlu0 %586
        %590 = vset.pattern.permute.xlu0 0
        %591 = vperm.xlu0 %590, %v561
        %v592 = vpop.permute.xlu0 %591
        %595 = vset.pattern.permute.xlu0 0
        %596 = vperm.xlu0 %595, %v562
        %v597 = vpop.permute.xlu0 %596
        %600 = vset.pattern.permute.xlu0 0
        %601 = vperm.xlu0 %600, %v563
        %v602 = vpop.permute.xlu0 %601
        %605 = vset.pattern.permute.xlu0 0
        %606 = vperm.xlu0 %605, %v564
        %v607 = vpop.permute.xlu0 %606
        %610 = vset.pattern.permute.xlu0 0
        %611 = vperm.xlu0 %610, %v565
        %v612 = vpop.permute.xlu0 %611
        %615 = vset.pattern.permute.xlu0 0
        %616 = vperm.xlu0 %615, %v566
        %v617 = vpop.permute.xlu0 %616
        %620 = vset.pattern.permute.xlu0 0
        %621 = vperm.xlu0 %620, %v567
        %v622 = vpop.permute.xlu0 %621
        %625 = vset.pattern.permute.xlu0 0
        %626 = vperm.xlu0 %625, %v568
        %v627 = vpop.permute.xlu0 %626
        %630 = vset.pattern.permute.xlu0 0
        %631 = vperm.xlu0 %630, %v569
        %v632 = vpop.permute.xlu0 %631
        %635 = vset.pattern.permute.xlu0 0
        %636 = vperm.xlu0 %635, %v570
        %v637 = vpop.permute.xlu0 %636
        %640 = vset.pattern.permute.xlu0 0
        %641 = vperm.xlu0 %640, %v571
        %v642 = vpop.permute.xlu0 %641
        %645 = vset.pattern.permute.xlu0 0
        %646 = vperm.xlu0 %645, %v572
        %v647 = vpop.permute.xlu0 %646
        %650 = vset.pattern.permute.xlu0 0
        %651 = vperm.xlu0 %650, %v573
        %v652 = vpop.permute.xlu0 %651
        %v654 = vadd.f32 %v542, %v577
        %v655 = vadd.f32 %v543, %v582
        %v656 = vadd.f32 %v544, %v587
        %v657 = vadd.f32 %v545, %v592
        %v658 = vadd.f32 %v546, %v597
        %v659 = vadd.f32 %v547, %v602
        %v660 = vadd.f32 %v548, %v607
        %v661 = vadd.f32 %v549, %v612
        %v662 = vadd.f32 %v550, %v617
        %v663 = vadd.f32 %v551, %v622
        %v664 = vadd.f32 %v552, %v627
        %v665 = vadd.f32 %v553, %v632
        %v666 = vadd.f32 %v554, %v637
        %v667 = vadd.f32 %v555, %v642
        %v668 = vadd.f32 %v556, %v647
        %v669 = vadd.f32 %v557, %v652
        %v670 = vmax.f32 %v654, 0.0
        %v671 = vmax.f32 %v655, 0.0
        %v672 = vmax.f32 %v656, 0.0
        %v673 = vmax.f32 %v657, 0.0
        %v674 = vmax.f32 %v658, 0.0
        %v675 = vmax.f32 %v659, 0.0
        %v676 = vmax.f32 %v660, 0.0
        %v677 = vmax.f32 %v661, 0.0
        %v678 = vmax.f32 %v662, 0.0
        %v679 = vmax.f32 %v663, 0.0
        %v680 = vmax.f32 %v664, 0.0
        %v681 = vmax.f32 %v665, 0.0
        %v682 = vmax.f32 %v666, 0.0
        %v683 = vmax.f32 %v667, 0.0
        %v684 = vmax.f32 %v668, 0.0
        %v685 = vmax.f32 %v669, 0.0
        %686 = vst [vmem:[#allocation2] sm:$0xff] %v670
        %687 = vst [vmem:[#allocation2 + $0x8] sm:$0xff] %v671
        %688 = vst [vmem:[#allocation2 + $0x10] sm:$0xff] %v672
        %689 = vst [vmem:[#allocation2 + $0x18] sm:$0xff] %v673
        %690 = vst [vmem:[#allocation2 + $0x20] sm:$0xff] %v674
        %691 = vst [vmem:[#allocation2 + $0x28] sm:$0xff] %v675
        %692 = vst [vmem:[#allocation2 + $0x30] sm:$0xff] %v676
        %693 = vst [vmem:[#allocation2 + $0x38] sm:$0xff] %v677
        %694 = vst [vmem:[#allocation2 + $0x40] sm:$0xff] %v678
        %695 = vst [vmem:[#allocation2 + $0x48] sm:$0xff] %v679
        %696 = vst [vmem:[#allocation2 + $0x50] sm:$0xff] %v680
        %697 = vst [vmem:[#allocation2 + $0x58] sm:$0xff] %v681
        %698 = vst [vmem:[#allocation2 + $0x60] sm:$0xff] %v682
        %699 = vst [vmem:[#allocation2 + $0x68] sm:$0xff] %v683
        %700 = vst [vmem:[#allocation2 + $0x70] sm:$0xff] %v684
        %701 = vst [vmem:[#allocation2 + $0x78] sm:$0xff] %v685
        %v702 = vpack.c.bf16 %v671, %v670
        %v703 = vpack.c.bf16 %v673, %v672
        %v704 = vpack.c.bf16 %v675, %v674
        %v705 = vpack.c.bf16 %v677, %v676
        %v706 = vpack.c.bf16 %v679, %v678
        %v707 = vpack.c.bf16 %v681, %v680
        %v708 = vpack.c.bf16 %v683, %v682
        %v709 = vpack.c.bf16 %v685, %v684
        %s710 = scalar_lea.vmem %s1, 64
        %v711 = vld [vmem:[%s710] sm:$0xf]
        %v712 = vld [vmem:[%s710 + $0x4] sm:$0xf]
        %v713 = vld [vmem:[%s710 + $0x8] sm:$0xf]
        %v714 = vld [vmem:[%s710 + $0xc] sm:$0xf]
        %v715 = vld [vmem:[%s710 + $0x10] sm:$0xf]
        %v716 = vld [vmem:[%s710 + $0x14] sm:$0xf]
        %v717 = vld [vmem:[%s710 + $0x18] sm:$0xf]
        %v718 = vld [vmem:[%s710 + $0x1c] sm:$0xf]
        %v719 = vld [vmem:[%s710 + $0x20] sm:$0xf]
        %v720 = vld [vmem:[%s710 + $0x24] sm:$0xf]
        %v721 = vld [vmem:[%s710 + $0x28] sm:$0xf]
        %v722 = vld [vmem:[%s710 + $0x2c] sm:$0xf]
        %v723 = vld [vmem:[%s710 + $0x30] sm:$0xf]
        %v724 = vld [vmem:[%s710 + $0x34] sm:$0xf]
        %v725 = vld [vmem:[%s710 + $0x38] sm:$0xf]
        %v726 = vld [vmem:[%s710 + $0x3c] sm:$0xf]
        %v743 = vunpack.c.l.b16 %v711
        %v744 = vunpack.c.l.b16 %v712
        %v745 = vunpack.c.l.b16 %v713
        %v746 = vunpack.c.l.b16 %v714
        %v747 = vunpack.c.l.b16 %v715
        %v748 = vunpack.c.l.b16 %v716
        %v749 = vunpack.c.l.b16 %v717
        %v750 = vunpack.c.l.b16 %v718
        %v751 = vunpack.c.l.b16 %v719
        %v752 = vunpack.c.l.b16 %v720
        %v753 = vunpack.c.l.b16 %v721
        %v754 = vunpack.c.l.b16 %v722
        %v755 = vunpack.c.l.b16 %v723
        %v756 = vunpack.c.l.b16 %v724
        %v757 = vunpack.c.l.b16 %v725
        %v758 = vunpack.c.l.b16 %v726
        %v759 = vpack.c.b16 %v744, %v743
        %v760 = vpack.c.b16 %v746, %v745
        %v761 = vpack.c.b16 %v748, %v747
        %v762 = vpack.c.b16 %v750, %v749
        %v763 = vpack.c.b16 %v752, %v751
        %v764 = vpack.c.b16 %v754, %v753
        %v765 = vpack.c.b16 %v756, %v755
        %v766 = vpack.c.b16 %v758, %v757
        %775 = vmatpush.bf16.msra.mxu0 %v709
        %776 = vmatpush.bf16.msra.mxu0 %v708
        %777 = vmatpush.bf16.msra.mxu0 %v707
        %778 = vmatpush.bf16.msra.mxu0 %v706
        %779 = vmatpush.bf16.msra.mxu0 %v705
        %780 = vmatpush.bf16.msra.mxu0 %v704
        %781 = vmatpush.bf16.msra.mxu0 %v703
        %782 = vmatpush.bf16.msra.mxu0 %v702
        %783 = vmatmul.bf16.gmra.mxu0 %v759
        %v784 = vpop.f32.mrf.mxu0
        %v785 = vadd.f32 0.0, %v784
        %v786 = vpop.f32.mrf.mxu0
        %v787 = vadd.f32 0.0, %v786
        %788 = vmatmul.bf16.gmra.mxu0 %v760
        %v789 = vpop.f32.mrf.mxu0
        %v790 = vadd.f32 0.0, %v789
        %v791 = vpop.f32.mrf.mxu0
        %v792 = vadd.f32 0.0, %v791
        %793 = vmatmul.bf16.gmra.mxu0 %v761
        %v794 = vpop.f32.mrf.mxu0
        %v795 = vadd.f32 0.0, %v794
        %v796 = vpop.f32.mrf.mxu0
        %v797 = vadd.f32 0.0, %v796
        %798 = vmatmul.bf16.gmra.mxu0 %v762
        %v799 = vpop.f32.mrf.mxu0
        %v800 = vadd.f32 0.0, %v799
        %v801 = vpop.f32.mrf.mxu0
        %v802 = vadd.f32 0.0, %v801
        %803 = vmatmul.bf16.gmra.mxu0 %v763
        %v804 = vpop.f32.mrf.mxu0
        %v805 = vadd.f32 0.0, %v804
        %v806 = vpop.f32.mrf.mxu0
        %v807 = vadd.f32 0.0, %v806
        %808 = vmatmul.bf16.gmra.mxu0 %v764
        %v809 = vpop.f32.mrf.mxu0
        %v810 = vadd.f32 0.0, %v809
        %v811 = vpop.f32.mrf.mxu0
        %v812 = vadd.f32 0.0, %v811
        %813 = vmatmul.bf16.gmra.mxu0 %v765
        %v814 = vpop.f32.mrf.mxu0
        %v815 = vadd.f32 0.0, %v814
        %v816 = vpop.f32.mrf.mxu0
        %v817 = vadd.f32 0.0, %v816
        %818 = vmatmul.bf16.gmra.mxu0 %v766
        %v819 = vpop.f32.mrf.mxu0
        %v820 = vadd.f32 0.0, %v819
        %v821 = vpop.f32.mrf.mxu0
        %v822 = vadd.f32 0.0, %v821
        %823 = vdwg.mxu0
        %s824 = scalar_lea.vmem %s2, 128
        %v825 = vld [vmem:[%s824] sm:$0xff]
        %v826 = vld [vmem:[%s824 + $0x8] sm:$0xff]
        %v827 = vld [vmem:[%s824 + $0x10] sm:$0xff]
        %v828 = vld [vmem:[%s824 + $0x18] sm:$0xff]
        %v829 = vld [vmem:[%s824 + $0x20] sm:$0xff]
        %v830 = vld [vmem:[%s824 + $0x28] sm:$0xff]
        %v831 = vld [vmem:[%s824 + $0x30] sm:$0xff]
        %v832 = vld [vmem:[%s824 + $0x38] sm:$0xff]
        %v833 = vld [vmem:[%s824 + $0x40] sm:$0xff]
        %v834 = vld [vmem:[%s824 + $0x48] sm:$0xff]
        %v835 = vld [vmem:[%s824 + $0x50] sm:$0xff]
        %v836 = vld [vmem:[%s824 + $0x58] sm:$0xff]
        %v837 = vld [vmem:[%s824 + $0x60] sm:$0xff]
        %v838 = vld [vmem:[%s824 + $0x68] sm:$0xff]
        %v839 = vld [vmem:[%s824 + $0x70] sm:$0xff]
        %v840 = vld [vmem:[%s824 + $0x78] sm:$0xff]
        %842 = vset.pattern.permute.xlu0 0
        %843 = vperm.xlu0 %842, %v825
        %v844 = vpop.permute.xlu0 %843
        %847 = vset.pattern.permute.xlu0 0
        %848 = vperm.xlu0 %847, %v826
        %v849 = vpop.permute.xlu0 %848
        %852 = vset.pattern.permute.xlu0 0
        %853 = vperm.xlu0 %852, %v827
        %v854 = vpop.permute.xlu0 %853
        %857 = vset.pattern.permute.xlu0 0
        %858 = vperm.xlu0 %857, %v828
        %v859 = vpop.permute.xlu0 %858
        %862 = vset.pattern.permute.xlu0 0
        %863 = vperm.xlu0 %862, %v829
        %v864 = vpop.permute.xlu0 %863
        %867 = vset.pattern.permute.xlu0 0
        %868 = vperm.xlu0 %867, %v830
        %v869 = vpop.permute.xlu0 %868
        %872 = vset.pattern.permute.xlu0 0
        %873 = vperm.xlu0 %872, %v831
        %v874 = vpop.permute.xlu0 %873
        %877 = vset.pattern.permute.xlu0 0
        %878 = vperm.xlu0 %877, %v832
        %v879 = vpop.permute.xlu0 %878
        %882 = vset.pattern.permute.xlu0 0
        %883 = vperm.xlu0 %882, %v833
        %v884 = vpop.permute.xlu0 %883
        %887 = vset.pattern.permute.xlu0 0
        %888 = vperm.xlu0 %887, %v834
        %v889 = vpop.permute.xlu0 %888
        %892 = vset.pattern.permute.xlu0 0
        %893 = vperm.xlu0 %892, %v835
        %v894 = vpop.permute.xlu0 %893
        %897 = vset.pattern.permute.xlu0 0
        %898 = vperm.xlu0 %897, %v836
        %v899 = vpop.permute.xlu0 %898
        %902 = vset.pattern.permute.xlu0 0
        %903 = vperm.xlu0 %902, %v837
        %v904 = vpop.permute.xlu0 %903
        %907 = vset.pattern.permute.xlu0 0
        %908 = vperm.xlu0 %907, %v838
        %v909 = vpop.permute.xlu0 %908
        %912 = vset.pattern.permute.xlu0 0
        %913 = vperm.xlu0 %912, %v839
        %v914 = vpop.permute.xlu0 %913
        %917 = vset.pattern.permute.xlu0 0
        %918 = vperm.xlu0 %917, %v840
        %v919 = vpop.permute.xlu0 %918
        %v921 = vmul.f32 %v785, %v844
        %v922 = vmul.f32 %v787, %v849
        %v923 = vmul.f32 %v790, %v854
        %v924 = vmul.f32 %v792, %v859
        %v925 = vmul.f32 %v795, %v864
        %v926 = vmul.f32 %v797, %v869
        %v927 = vmul.f32 %v800, %v874
        %v928 = vmul.f32 %v802, %v879
        %v929 = vmul.f32 %v805, %v884
        %v930 = vmul.f32 %v807, %v889
        %v931 = vmul.f32 %v810, %v894
        %v932 = vmul.f32 %v812, %v899
        %v933 = vmul.f32 %v815, %v904
        %v934 = vmul.f32 %v817, %v909
        %v935 = vmul.f32 %v820, %v914
        %v936 = vmul.f32 %v822, %v919
        %s937 = scalar_lea.vmem %s3, 128
        %v938 = vld [vmem:[%s937] sm:$0xff]
        %v939 = vld [vmem:[%s937 + $0x8] sm:$0xff]
        %v940 = vld [vmem:[%s937 + $0x10] sm:$0xff]
        %v941 = vld [vmem:[%s937 + $0x18] sm:$0xff]
        %v942 = vld [vmem:[%s937 + $0x20] sm:$0xff]
        %v943 = vld [vmem:[%s937 + $0x28] sm:$0xff]
        %v944 = vld [vmem:[%s937 + $0x30] sm:$0xff]
        %v945 = vld [vmem:[%s937 + $0x38] sm:$0xff]
        %v946 = vld [vmem:[%s937 + $0x40] sm:$0xff]
        %v947 = vld [vmem:[%s937 + $0x48] sm:$0xff]
        %v948 = vld [vmem:[%s937 + $0x50] sm:$0xff]
        %v949 = vld [vmem:[%s937 + $0x58] sm:$0xff]
        %v950 = vld [vmem:[%s937 + $0x60] sm:$0xff]
        %v951 = vld [vmem:[%s937 + $0x68] sm:$0xff]
        %v952 = vld [vmem:[%s937 + $0x70] sm:$0xff]
        %v953 = vld [vmem:[%s937 + $0x78] sm:$0xff]
        %955 = vset.pattern.permute.xlu0 0
        %956 = vperm.xlu0 %955, %v938
        %v957 = vpop.permute.xlu0 %956
        %960 = vset.pattern.permute.xlu0 0
        %961 = vperm.xlu0 %960, %v939
        %v962 = vpop.permute.xlu0 %961
        %965 = vset.pattern.permute.xlu0 0
        %966 = vperm.xlu0 %965, %v940
        %v967 = vpop.permute.xlu0 %966
        %970 = vset.pattern.permute.xlu0 0
        %971 = vperm.xlu0 %970, %v941
        %v972 = vpop.permute.xlu0 %971
        %975 = vset.pattern.permute.xlu0 0
        %976 = vperm.xlu0 %975, %v942
        %v977 = vpop.permute.xlu0 %976
        %980 = vset.pattern.permute.xlu0 0
        %981 = vperm.xlu0 %980, %v943
        %v982 = vpop.permute.xlu0 %981
        %985 = vset.pattern.permute.xlu0 0
        %986 = vperm.xlu0 %985, %v944
        %v987 = vpop.permute.xlu0 %986
        %990 = vset.pattern.permute.xlu0 0
        %991 = vperm.xlu0 %990, %v945
        %v992 = vpop.permute.xlu0 %991
        %995 = vset.pattern.permute.xlu0 0
        %996 = vperm.xlu0 %995, %v946
        %v997 = vpop.permute.xlu0 %996
        %1000 = vset.pattern.permute.xlu0 0
        %1001 = vperm.xlu0 %1000, %v947
        %v1002 = vpop.permute.xlu0 %1001
        %1005 = vset.pattern.permute.xlu0 0
        %1006 = vperm.xlu0 %1005, %v948
        %v1007 = vpop.permute.xlu0 %1006
        %1010 = vset.pattern.permute.xlu0 0
        %1011 = vperm.xlu0 %1010, %v949
        %v1012 = vpop.permute.xlu0 %1011
        %1015 = vset.pattern.permute.xlu0 0
        %1016 = vperm.xlu0 %1015, %v950
        %v1017 = vpop.permute.xlu0 %1016
        %1020 = vset.pattern.permute.xlu0 0
        %1021 = vperm.xlu0 %1020, %v951
        %v1022 = vpop.permute.xlu0 %1021
        %1025 = vset.pattern.permute.xlu0 0
        %1026 = vperm.xlu0 %1025, %v952
        %v1027 = vpop.permute.xlu0 %1026
        %1030 = vset.pattern.permute.xlu0 0
        %1031 = vperm.xlu0 %1030, %v953
        %v1032 = vpop.permute.xlu0 %1031
        %v1034 = vadd.f32 %v921, %v957
        %v1035 = vadd.f32 %v922, %v962
        %v1036 = vadd.f32 %v923, %v967
        %v1037 = vadd.f32 %v924, %v972
        %v1038 = vadd.f32 %v925, %v977
        %v1039 = vadd.f32 %v926, %v982
        %v1040 = vadd.f32 %v927, %v987
        %v1041 = vadd.f32 %v928, %v992
        %v1042 = vadd.f32 %v929, %v997
        %v1043 = vadd.f32 %v930, %v1002
        %v1044 = vadd.f32 %v931, %v1007
        %v1045 = vadd.f32 %v932, %v1012
        %v1046 = vadd.f32 %v933, %v1017
        %v1047 = vadd.f32 %v934, %v1022
        %v1048 = vadd.f32 %v935, %v1027
        %v1049 = vadd.f32 %v936, %v1032
        %v1050 = vmax.f32 %v1034, 0.0
        %v1051 = vmax.f32 %v1035, 0.0
        %v1052 = vmax.f32 %v1036, 0.0
        %v1053 = vmax.f32 %v1037, 0.0
        %v1054 = vmax.f32 %v1038, 0.0
        %v1055 = vmax.f32 %v1039, 0.0
        %v1056 = vmax.f32 %v1040, 0.0
        %v1057 = vmax.f32 %v1041, 0.0
        %v1058 = vmax.f32 %v1042, 0.0
        %v1059 = vmax.f32 %v1043, 0.0
        %v1060 = vmax.f32 %v1044, 0.0
        %v1061 = vmax.f32 %v1045, 0.0
        %v1062 = vmax.f32 %v1046, 0.0
        %v1063 = vmax.f32 %v1047, 0.0
        %v1064 = vmax.f32 %v1048, 0.0
        %v1065 = vmax.f32 %v1049, 0.0
        %s1066 = scalar_lea.vmem [#allocation2], 128
        %1067 = vst [vmem:[%s1066] sm:$0xff] %v1050
        %1068 = vst [vmem:[%s1066 + $0x8] sm:$0xff] %v1051
        %1069 = vst [vmem:[%s1066 + $0x10] sm:$0xff] %v1052
        %1070 = vst [vmem:[%s1066 + $0x18] sm:$0xff] %v1053
        %1071 = vst [vmem:[%s1066 + $0x20] sm:$0xff] %v1054
        %1072 = vst [vmem:[%s1066 + $0x28] sm:$0xff] %v1055
        %1073 = vst [vmem:[%s1066 + $0x30] sm:$0xff] %v1056
        %1074 = vst [vmem:[%s1066 + $0x38] sm:$0xff] %v1057
        %1075 = vst [vmem:[%s1066 + $0x40] sm:$0xff] %v1058
        %1076 = vst [vmem:[%s1066 + $0x48] sm:$0xff] %v1059
        %1077 = vst [vmem:[%s1066 + $0x50] sm:$0xff] %v1060
        %1078 = vst [vmem:[%s1066 + $0x58] sm:$0xff] %v1061
        %1079 = vst [vmem:[%s1066 + $0x60] sm:$0xff] %v1062
        %1080 = vst [vmem:[%s1066 + $0x68] sm:$0xff] %v1063
        %1081 = vst [vmem:[%s1066 + $0x70] sm:$0xff] %v1064
        %1082 = vst [vmem:[%s1066 + $0x78] sm:$0xff] %v1065
        %v1083 = vpack.c.bf16 %v1051, %v1050
        %v1084 = vpack.c.bf16 %v1053, %v1052
        %v1085 = vpack.c.bf16 %v1055, %v1054
        %v1086 = vpack.c.bf16 %v1057, %v1056
        %v1087 = vpack.c.bf16 %v1059, %v1058
        %v1088 = vpack.c.bf16 %v1061, %v1060
        %v1089 = vpack.c.bf16 %v1063, %v1062
        %v1090 = vpack.c.bf16 %v1065, %v1064
        %s1091 = scalar_lea.vmem %s1, 128
        %v1092 = vld [vmem:[%s1091] sm:$0xf]
        %v1093 = vld [vmem:[%s1091 + $0x4] sm:$0xf]
        %v1094 = vld [vmem:[%s1091 + $0x8] sm:$0xf]
        %v1095 = vld [vmem:[%s1091 + $0xc] sm:$0xf]
        %v1096 = vld [vmem:[%s1091 + $0x10] sm:$0xf]
        %v1097 = vld [vmem:[%s1091 + $0x14] sm:$0xf]
        %v1098 = vld [vmem:[%s1091 + $0x18] sm:$0xf]
        %v1099 = vld [vmem:[%s1091 + $0x1c] sm:$0xf]
        %v1100 = vld [vmem:[%s1091 + $0x20] sm:$0xf]
        %v1101 = vld [vmem:[%s1091 + $0x24] sm:$0xf]
        %v1102 = vld [vmem:[%s1091 + $0x28] sm:$0xf]
        %v1103 = vld [vmem:[%s1091 + $0x2c] sm:$0xf]
        %v1104 = vld [vmem:[%s1091 + $0x30] sm:$0xf]
        %v1105 = vld [vmem:[%s1091 + $0x34] sm:$0xf]
        %v1106 = vld [vmem:[%s1091 + $0x38] sm:$0xf]
        %v1107 = vld [vmem:[%s1091 + $0x3c] sm:$0xf]
        %v1124 = vunpack.c.l.b16 %v1092
        %v1125 = vunpack.c.l.b16 %v1093
        %v1126 = vunpack.c.l.b16 %v1094
        %v1127 = vunpack.c.l.b16 %v1095
        %v1128 = vunpack.c.l.b16 %v1096
        %v1129 = vunpack.c.l.b16 %v1097
        %v1130 = vunpack.c.l.b16 %v1098
        %v1131 = vunpack.c.l.b16 %v1099
        %v1132 = vunpack.c.l.b16 %v1100
        %v1133 = vunpack.c.l.b16 %v1101
        %v1134 = vunpack.c.l.b16 %v1102
        %v1135 = vunpack.c.l.b16 %v1103
        %v1136 = vunpack.c.l.b16 %v1104
        %v1137 = vunpack.c.l.b16 %v1105
        %v1138 = vunpack.c.l.b16 %v1106
        %v1139 = vunpack.c.l.b16 %v1107
        %v1140 = vpack.c.b16 %v1125, %v1124
        %v1141 = vpack.c.b16 %v1127, %v1126
        %v1142 = vpack.c.b16 %v1129, %v1128
        %v1143 = vpack.c.b16 %v1131, %v1130
        %v1144 = vpack.c.b16 %v1133, %v1132
        %v1145 = vpack.c.b16 %v1135, %v1134
        %v1146 = vpack.c.b16 %v1137, %v1136
        %v1147 = vpack.c.b16 %v1139, %v1138
        %1156 = vmatpush.bf16.msra.mxu0 %v1090
        %1157 = vmatpush.bf16.msra.mxu0 %v1089
        %1158 = vmatpush.bf16.msra.mxu0 %v1088
        %1159 = vmatpush.bf16.msra.mxu0 %v1087
        %1160 = vmatpush.bf16.msra.mxu0 %v1086
        %1161 = vmatpush.bf16.msra.mxu0 %v1085
        %1162 = vmatpush.bf16.msra.mxu0 %v1084
        %1163 = vmatpush.bf16.msra.mxu0 %v1083
        %1164 = vmatmul.bf16.gmra.mxu0 %v1140
        %v1165 = vpop.f32.mrf.mxu0
        %v1166 = vadd.f32 0.0, %v1165
        %v1167 = vpop.f32.mrf.mxu0
        %v1168 = vadd.f32 0.0, %v1167
        %1169 = vmatmul.bf16.gmra.mxu0 %v1141
        %v1170 = vpop.f32.mrf.mxu0
        %v1171 = vadd.f32 0.0, %v1170
        %v1172 = vpop.f32.mrf.mxu0
        %v1173 = vadd.f32 0.0, %v1172
        %1174 = vmatmul.bf16.gmra.mxu0 %v1142
        %v1175 = vpop.f32.mrf.mxu0
        %v1176 = vadd.f32 0.0, %v1175
        %v1177 = vpop.f32.mrf.mxu0
        %v1178 = vadd.f32 0.0, %v1177
        %1179 = vmatmul.bf16.gmra.mxu0 %v1143
        %v1180 = vpop.f32.mrf.mxu0
        %v1181 = vadd.f32 0.0, %v1180
        %v1182 = vpop.f32.mrf.mxu0
        %v1183 = vadd.f32 0.0, %v1182
        %1184 = vmatmul.bf16.gmra.mxu0 %v1144
        %v1185 = vpop.f32.mrf.mxu0
        %v1186 = vadd.f32 0.0, %v1185
        %v1187 = vpop.f32.mrf.mxu0
        %v1188 = vadd.f32 0.0, %v1187
        %1189 = vmatmul.bf16.gmra.mxu0 %v1145
        %v1190 = vpop.f32.mrf.mxu0
        %v1191 = vadd.f32 0.0, %v1190
        %v1192 = vpop.f32.mrf.mxu0
        %v1193 = vadd.f32 0.0, %v1192
        %1194 = vmatmul.bf16.gmra.mxu0 %v1146
        %v1195 = vpop.f32.mrf.mxu0
        %v1196 = vadd.f32 0.0, %v1195
        %v1197 = vpop.f32.mrf.mxu0
        %v1198 = vadd.f32 0.0, %v1197
        %1199 = vmatmul.bf16.gmra.mxu0 %v1147
        %v1200 = vpop.f32.mrf.mxu0
        %v1201 = vadd.f32 0.0, %v1200
        %v1202 = vpop.f32.mrf.mxu0
        %v1203 = vadd.f32 0.0, %v1202
        %1204 = vdwg.mxu0
        %s1205 = scalar_lea.vmem %s2, 256
        %v1206 = vld [vmem:[%s1205] sm:$0xff]
        %v1207 = vld [vmem:[%s1205 + $0x8] sm:$0xff]
        %v1208 = vld [vmem:[%s1205 + $0x10] sm:$0xff]
        %v1209 = vld [vmem:[%s1205 + $0x18] sm:$0xff]
        %v1210 = vld [vmem:[%s1205 + $0x20] sm:$0xff]
        %v1211 = vld [vmem:[%s1205 + $0x28] sm:$0xff]
        %v1212 = vld [vmem:[%s1205 + $0x30] sm:$0xff]
        %v1213 = vld [vmem:[%s1205 + $0x38] sm:$0xff]
        %v1214 = vld [vmem:[%s1205 + $0x40] sm:$0xff]
        %v1215 = vld [vmem:[%s1205 + $0x48] sm:$0xff]
        %v1216 = vld [vmem:[%s1205 + $0x50] sm:$0xff]
        %v1217 = vld [vmem:[%s1205 + $0x58] sm:$0xff]
        %v1218 = vld [vmem:[%s1205 + $0x60] sm:$0xff]
        %v1219 = vld [vmem:[%s1205 + $0x68] sm:$0xff]
        %v1220 = vld [vmem:[%s1205 + $0x70] sm:$0xff]
        %v1221 = vld [vmem:[%s1205 + $0x78] sm:$0xff]
        %1223 = vset.pattern.permute.xlu0 0
        %1224 = vperm.xlu0 %1223, %v1206
        %v1225 = vpop.permute.xlu0 %1224
        %1228 = vset.pattern.permute.xlu0 0
        %1229 = vperm.xlu0 %1228, %v1207
        %v1230 = vpop.permute.xlu0 %1229
        %1233 = vset.pattern.permute.xlu0 0
        %1234 = vperm.xlu0 %1233, %v1208
        %v1235 = vpop.permute.xlu0 %1234
        %1238 = vset.pattern.permute.xlu0 0
        %1239 = vperm.xlu0 %1238, %v1209
        %v1240 = vpop.permute.xlu0 %1239
        %1243 = vset.pattern.permute.xlu0 0
        %1244 = vperm.xlu0 %1243, %v1210
        %v1245 = vpop.permute.xlu0 %1244
        %1248 = vset.pattern.permute.xlu0 0
        %1249 = vperm.xlu0 %1248, %v1211
        %v1250 = vpop.permute.xlu0 %1249
        %1253 = vset.pattern.permute.xlu0 0
        %1254 = vperm.xlu0 %1253, %v1212
        %v1255 = vpop.permute.xlu0 %1254
        %1258 = vset.pattern.permute.xlu0 0
        %1259 = vperm.xlu0 %1258, %v1213
        %v1260 = vpop.permute.xlu0 %1259
        %1263 = vset.pattern.permute.xlu0 0
        %1264 = vperm.xlu0 %1263, %v1214
        %v1265 = vpop.permute.xlu0 %1264
        %1268 = vset.pattern.permute.xlu0 0
        %1269 = vperm.xlu0 %1268, %v1215
        %v1270 = vpop.permute.xlu0 %1269
        %1273 = vset.pattern.permute.xlu0 0
        %1274 = vperm.xlu0 %1273, %v1216
        %v1275 = vpop.permute.xlu0 %1274
        %1278 = vset.pattern.permute.xlu0 0
        %1279 = vperm.xlu0 %1278, %v1217
        %v1280 = vpop.permute.xlu0 %1279
        %1283 = vset.pattern.permute.xlu0 0
        %1284 = vperm.xlu0 %1283, %v1218
        %v1285 = vpop.permute.xlu0 %1284
        %1288 = vset.pattern.permute.xlu0 0
        %1289 = vperm.xlu0 %1288, %v1219
        %v1290 = vpop.permute.xlu0 %1289
        %1293 = vset.pattern.permute.xlu0 0
        %1294 = vperm.xlu0 %1293, %v1220
        %v1295 = vpop.permute.xlu0 %1294
        %1298 = vset.pattern.permute.xlu0 0
        %1299 = vperm.xlu0 %1298, %v1221
        %v1300 = vpop.permute.xlu0 %1299
        %v1302 = vmul.f32 %v1166, %v1225
        %v1303 = vmul.f32 %v1168, %v1230
        %v1304 = vmul.f32 %v1171, %v1235
        %v1305 = vmul.f32 %v1173, %v1240
        %v1306 = vmul.f32 %v1176, %v1245
        %v1307 = vmul.f32 %v1178, %v1250
        %v1308 = vmul.f32 %v1181, %v1255
        %v1309 = vmul.f32 %v1183, %v1260
        %v1310 = vmul.f32 %v1186, %v1265
        %v1311 = vmul.f32 %v1188, %v1270
        %v1312 = vmul.f32 %v1191, %v1275
        %v1313 = vmul.f32 %v1193, %v1280
        %v1314 = vmul.f32 %v1196, %v1285
        %v1315 = vmul.f32 %v1198, %v1290
        %v1316 = vmul.f32 %v1201, %v1295
        %v1317 = vmul.f32 %v1203, %v1300
        %s1318 = scalar_lea.vmem %s3, 256
        %v1319 = vld [vmem:[%s1318] sm:$0xff]
        %v1320 = vld [vmem:[%s1318 + $0x8] sm:$0xff]
        %v1321 = vld [vmem:[%s1318 + $0x10] sm:$0xff]
        %v1322 = vld [vmem:[%s1318 + $0x18] sm:$0xff]
        %v1323 = vld [vmem:[%s1318 + $0x20] sm:$0xff]
        %v1324 = vld [vmem:[%s1318 + $0x28] sm:$0xff]
        %v1325 = vld [vmem:[%s1318 + $0x30] sm:$0xff]
        %v1326 = vld [vmem:[%s1318 + $0x38] sm:$0xff]
        %v1327 = vld [vmem:[%s1318 + $0x40] sm:$0xff]
        %v1328 = vld [vmem:[%s1318 + $0x48] sm:$0xff]
        %v1329 = vld [vmem:[%s1318 + $0x50] sm:$0xff]
        %v1330 = vld [vmem:[%s1318 + $0x58] sm:$0xff]
        %v1331 = vld [vmem:[%s1318 + $0x60] sm:$0xff]
        %v1332 = vld [vmem:[%s1318 + $0x68] sm:$0xff]
        %v1333 = vld [vmem:[%s1318 + $0x70] sm:$0xff]
        %v1334 = vld [vmem:[%s1318 + $0x78] sm:$0xff]
        %1336 = vset.pattern.permute.xlu0 0
        %1337 = vperm.xlu0 %1336, %v1319
        %v1338 = vpop.permute.xlu0 %1337
        %1341 = vset.pattern.permute.xlu0 0
        %1342 = vperm.xlu0 %1341, %v1320
        %v1343 = vpop.permute.xlu0 %1342
        %1346 = vset.pattern.permute.xlu0 0
        %1347 = vperm.xlu0 %1346, %v1321
        %v1348 = vpop.permute.xlu0 %1347
        %1351 = vset.pattern.permute.xlu0 0
        %1352 = vperm.xlu0 %1351, %v1322
        %v1353 = vpop.permute.xlu0 %1352
        %1356 = vset.pattern.permute.xlu0 0
        %1357 = vperm.xlu0 %1356, %v1323
        %v1358 = vpop.permute.xlu0 %1357
        %1361 = vset.pattern.permute.xlu0 0
        %1362 = vperm.xlu0 %1361, %v1324
        %v1363 = vpop.permute.xlu0 %1362
        %1366 = vset.pattern.permute.xlu0 0
        %1367 = vperm.xlu0 %1366, %v1325
        %v1368 = vpop.permute.xlu0 %1367
        %1371 = vset.pattern.permute.xlu0 0
        %1372 = vperm.xlu0 %1371, %v1326
        %v1373 = vpop.permute.xlu0 %1372
        %1376 = vset.pattern.permute.xlu0 0
        %1377 = vperm.xlu0 %1376, %v1327
        %v1378 = vpop.permute.xlu0 %1377
        %1381 = vset.pattern.permute.xlu0 0
        %1382 = vperm.xlu0 %1381, %v1328
        %v1383 = vpop.permute.xlu0 %1382
        %1386 = vset.pattern.permute.xlu0 0
        %1387 = vperm.xlu0 %1386, %v1329
        %v1388 = vpop.permute.xlu0 %1387
        %1391 = vset.pattern.permute.xlu0 0
        %1392 = vperm.xlu0 %1391, %v1330
        %v1393 = vpop.permute.xlu0 %1392
        %1396 = vset.pattern.permute.xlu0 0
        %1397 = vperm.xlu0 %1396, %v1331
        %v1398 = vpop.permute.xlu0 %1397
        %1401 = vset.pattern.permute.xlu0 0
        %1402 = vperm.xlu0 %1401, %v1332
        %v1403 = vpop.permute.xlu0 %1402
        %1406 = vset.pattern.permute.xlu0 0
        %1407 = vperm.xlu0 %1406, %v1333
        %v1408 = vpop.permute.xlu0 %1407
        %1411 = vset.pattern.permute.xlu0 0
        %1412 = vperm.xlu0 %1411, %v1334
        %v1413 = vpop.permute.xlu0 %1412
        %v1415 = vadd.f32 %v1302, %v1338
        %v1416 = vadd.f32 %v1303, %v1343
        %v1417 = vadd.f32 %v1304, %v1348
        %v1418 = vadd.f32 %v1305, %v1353
        %v1419 = vadd.f32 %v1306, %v1358
        %v1420 = vadd.f32 %v1307, %v1363
        %v1421 = vadd.f32 %v1308, %v1368
        %v1422 = vadd.f32 %v1309, %v1373
        %v1423 = vadd.f32 %v1310, %v1378
        %v1424 = vadd.f32 %v1311, %v1383
        %v1425 = vadd.f32 %v1312, %v1388
        %v1426 = vadd.f32 %v1313, %v1393
        %v1427 = vadd.f32 %v1314, %v1398
        %v1428 = vadd.f32 %v1315, %v1403
        %v1429 = vadd.f32 %v1316, %v1408
        %v1430 = vadd.f32 %v1317, %v1413
        %v1431 = vmax.f32 %v1415, 0.0
        %v1432 = vmax.f32 %v1416, 0.0
        %v1433 = vmax.f32 %v1417, 0.0
        %v1434 = vmax.f32 %v1418, 0.0
        %v1435 = vmax.f32 %v1419, 0.0
        %v1436 = vmax.f32 %v1420, 0.0
        %v1437 = vmax.f32 %v1421, 0.0
        %v1438 = vmax.f32 %v1422, 0.0
        %v1439 = vmax.f32 %v1423, 0.0
        %v1440 = vmax.f32 %v1424, 0.0
        %v1441 = vmax.f32 %v1425, 0.0
        %v1442 = vmax.f32 %v1426, 0.0
        %v1443 = vmax.f32 %v1427, 0.0
        %v1444 = vmax.f32 %v1428, 0.0
        %v1445 = vmax.f32 %v1429, 0.0
        %v1446 = vmax.f32 %v1430, 0.0
        %v1447 = vld [vmem:[#allocation2] sm:$0xff]
        %v1448 = vld [vmem:[#allocation2 + $0x8] sm:$0xff]
        %v1449 = vld [vmem:[#allocation2 + $0x10] sm:$0xff]
        %v1450 = vld [vmem:[#allocation2 + $0x18] sm:$0xff]
        %v1451 = vld [vmem:[#allocation2 + $0x20] sm:$0xff]
        %v1452 = vld [vmem:[#allocation2 + $0x28] sm:$0xff]
        %v1453 = vld [vmem:[#allocation2 + $0x30] sm:$0xff]
        %v1454 = vld [vmem:[#allocation2 + $0x38] sm:$0xff]
        %v1455 = vld [vmem:[#allocation2 + $0x40] sm:$0xff]
        %v1456 = vld [vmem:[#allocation2 + $0x48] sm:$0xff]
        %v1457 = vld [vmem:[#allocation2 + $0x50] sm:$0xff]
        %v1458 = vld [vmem:[#allocation2 + $0x58] sm:$0xff]
        %v1459 = vld [vmem:[#allocation2 + $0x60] sm:$0xff]
        %v1460 = vld [vmem:[#allocation2 + $0x68] sm:$0xff]
        %v1461 = vld [vmem:[#allocation2 + $0x70] sm:$0xff]
        %v1462 = vld [vmem:[#allocation2 + $0x78] sm:$0xff]
        %v1463 = vadd.f32 %v1431, %v1447
        %v1464 = vadd.f32 %v1432, %v1448
        %v1465 = vadd.f32 %v1433, %v1449
        %v1466 = vadd.f32 %v1434, %v1450
        %v1467 = vadd.f32 %v1435, %v1451
        %v1468 = vadd.f32 %v1436, %v1452
        %v1469 = vadd.f32 %v1437, %v1453
        %v1470 = vadd.f32 %v1438, %v1454
        %v1471 = vadd.f32 %v1439, %v1455
        %v1472 = vadd.f32 %v1440, %v1456
        %v1473 = vadd.f32 %v1441, %v1457
        %v1474 = vadd.f32 %v1442, %v1458
        %v1475 = vadd.f32 %v1443, %v1459
        %v1476 = vadd.f32 %v1444, %v1460
        %v1477 = vadd.f32 %v1445, %v1461
        %v1478 = vadd.f32 %v1446, %v1462
        %s1479 = scalar_lea.vmem [#allocation2], 256
        %1480 = vst [vmem:[%s1479] sm:$0xff] %v1463
        %1481 = vst [vmem:[%s1479 + $0x8] sm:$0xff] %v1464
        %1482 = vst [vmem:[%s1479 + $0x10] sm:$0xff] %v1465
        %1483 = vst [vmem:[%s1479 + $0x18] sm:$0xff] %v1466
        %1484 = vst [vmem:[%s1479 + $0x20] sm:$0xff] %v1467
        %1485 = vst [vmem:[%s1479 + $0x28] sm:$0xff] %v1468
        %1486 = vst [vmem:[%s1479 + $0x30] sm:$0xff] %v1469
        %1487 = vst [vmem:[%s1479 + $0x38] sm:$0xff] %v1470
        %1488 = vst [vmem:[%s1479 + $0x40] sm:$0xff] %v1471
        %1489 = vst [vmem:[%s1479 + $0x48] sm:$0xff] %v1472
        %1490 = vst [vmem:[%s1479 + $0x50] sm:$0xff] %v1473
        %1491 = vst [vmem:[%s1479 + $0x58] sm:$0xff] %v1474
        %1492 = vst [vmem:[%s1479 + $0x60] sm:$0xff] %v1475
        %1493 = vst [vmem:[%s1479 + $0x68] sm:$0xff] %v1476
        %1494 = vst [vmem:[%s1479 + $0x70] sm:$0xff] %v1477
        %1495 = vst [vmem:[%s1479 + $0x78] sm:$0xff] %v1478
        %v1496 = vpack.c.bf16 %v1464, %v1463
        %v1497 = vpack.c.bf16 %v1466, %v1465
        %v1498 = vpack.c.bf16 %v1468, %v1467
        %v1499 = vpack.c.bf16 %v1470, %v1469
        %v1500 = vpack.c.bf16 %v1472, %v1471
        %v1501 = vpack.c.bf16 %v1474, %v1473
        %v1502 = vpack.c.bf16 %v1476, %v1475
        %v1503 = vpack.c.bf16 %v1478, %v1477
        %s1504 = scalar_lea.vmem %s1, 192
        %v1505 = vld [vmem:[%s1504] sm:$0xf]
        %v1506 = vld [vmem:[%s1504 + $0x4] sm:$0xf]
        %v1507 = vld [vmem:[%s1504 + $0x8] sm:$0xf]
        %v1508 = vld [vmem:[%s1504 + $0xc] sm:$0xf]
        %v1509 = vld [vmem:[%s1504 + $0x10] sm:$0xf]
        %v1510 = vld [vmem:[%s1504 + $0x14] sm:$0xf]
        %v1511 = vld [vmem:[%s1504 + $0x18] sm:$0xf]
        %v1512 = vld [vmem:[%s1504 + $0x1c] sm:$0xf]
        %v1513 = vld [vmem:[%s1504 + $0x20] sm:$0xf]
        %v1514 = vld [vmem:[%s1504 + $0x24] sm:$0xf]
        %v1515 = vld [vmem:[%s1504 + $0x28] sm:$0xf]
        %v1516 = vld [vmem:[%s1504 + $0x2c] sm:$0xf]
        %v1517 = vld [vmem:[%s1504 + $0x30] sm:$0xf]
        %v1518 = vld [vmem:[%s1504 + $0x34] sm:$0xf]
        %v1519 = vld [vmem:[%s1504 + $0x38] sm:$0xf]
        %v1520 = vld [vmem:[%s1504 + $0x3c] sm:$0xf]
        %v1537 = vunpack.c.l.b16 %v1505
        %v1538 = vunpack.c.l.b16 %v1506
        %v1539 = vunpack.c.l.b16 %v1507
        %v1540 = vunpack.c.l.b16 %v1508
        %v1541 = vunpack.c.l.b16 %v1509
        %v1542 = vunpack.c.l.b16 %v1510
        %v1543 = vunpack.c.l.b16 %v1511
        %v1544 = vunpack.c.l.b16 %v1512
        %v1545 = vunpack.c.l.b16 %v1513
        %v1546 = vunpack.c.l.b16 %v1514
        %v1547 = vunpack.c.l.b16 %v1515
        %v1548 = vunpack.c.l.b16 %v1516
        %v1549 = vunpack.c.l.b16 %v1517
        %v1550 = vunpack.c.l.b16 %v1518
        %v1551 = vunpack.c.l.b16 %v1519
        %v1552 = vunpack.c.l.b16 %v1520
        %v1553 = vpack.c.b16 %v1538, %v1537
        %v1554 = vpack.c.b16 %v1540, %v1539
        %v1555 = vpack.c.b16 %v1542, %v1541
        %v1556 = vpack.c.b16 %v1544, %v1543
        %v1557 = vpack.c.b16 %v1546, %v1545
        %v1558 = vpack.c.b16 %v1548, %v1547
        %v1559 = vpack.c.b16 %v1550, %v1549
        %v1560 = vpack.c.b16 %v1552, %v1551
        %1569 = vmatpush.bf16.msra.mxu0 %v1503
        %1570 = vmatpush.bf16.msra.mxu0 %v1502
        %1571 = vmatpush.bf16.msra.mxu0 %v1501
        %1572 = vmatpush.bf16.msra.mxu0 %v1500
        %1573 = vmatpush.bf16.msra.mxu0 %v1499
        %1574 = vmatpush.bf16.msra.mxu0 %v1498
        %1575 = vmatpush.bf16.msra.mxu0 %v1497
        %1576 = vmatpush.bf16.msra.mxu0 %v1496
        %1577 = vmatmul.bf16.gmra.mxu0 %v1553
        %v1578 = vpop.f32.mrf.mxu0
        %v1579 = vadd.f32 0.0, %v1578
        %v1580 = vpop.f32.mrf.mxu0
        %v1581 = vadd.f32 0.0, %v1580
        %1582 = vmatmul.bf16.gmra.mxu0 %v1554
        %v1583 = vpop.f32.mrf.mxu0
        %v1584 = vadd.f32 0.0, %v1583
        %v1585 = vpop.f32.mrf.mxu0
        %v1586 = vadd.f32 0.0, %v1585
        %1587 = vmatmul.bf16.gmra.mxu0 %v1555
        %v1588 = vpop.f32.mrf.mxu0
        %v1589 = vadd.f32 0.0, %v1588
        %v1590 = vpop.f32.mrf.mxu0
        %v1591 = vadd.f32 0.0, %v1590
        %1592 = vmatmul.bf16.gmra.mxu0 %v1556
        %v1593 = vpop.f32.mrf.mxu0
        %v1594 = vadd.f32 0.0, %v1593
        %v1595 = vpop.f32.mrf.mxu0
        %v1596 = vadd.f32 0.0, %v1595
        %1597 = vmatmul.bf16.gmra.mxu0 %v1557
        %v1598 = vpop.f32.mrf.mxu0
        %v1599 = vadd.f32 0.0, %v1598
        %v1600 = vpop.f32.mrf.mxu0
        %v1601 = vadd.f32 0.0, %v1600
        %1602 = vmatmul.bf16.gmra.mxu0 %v1558
        %v1603 = vpop.f32.mrf.mxu0
        %v1604 = vadd.f32 0.0, %v1603
        %v1605 = vpop.f32.mrf.mxu0
        %v1606 = vadd.f32 0.0, %v1605
        %1607 = vmatmul.bf16.gmra.mxu0 %v1559
        %v1608 = vpop.f32.mrf.mxu0
        %v1609 = vadd.f32 0.0, %v1608
        %v1610 = vpop.f32.mrf.mxu0
        %v1611 = vadd.f32 0.0, %v1610
        %1612 = vmatmul.bf16.gmra.mxu0 %v1560
        %v1613 = vpop.f32.mrf.mxu0
        %v1614 = vadd.f32 0.0, %v1613
        %v1615 = vpop.f32.mrf.mxu0
        %v1616 = vadd.f32 0.0, %v1615
        %1617 = vdwg.mxu0
        %s1618 = scalar_lea.vmem %s2, 384
        %v1619 = vld [vmem:[%s1618] sm:$0xff]
        %v1620 = vld [vmem:[%s1618 + $0x8] sm:$0xff]
        %v1621 = vld [vmem:[%s1618 + $0x10] sm:$0xff]
        %v1622 = vld [vmem:[%s1618 + $0x18] sm:$0xff]
        %v1623 = vld [vmem:[%s1618 + $0x20] sm:$0xff]
        %v1624 = vld [vmem:[%s1618 + $0x28] sm:$0xff]
        %v1625 = vld [vmem:[%s1618 + $0x30] sm:$0xff]
        %v1626 = vld [vmem:[%s1618 + $0x38] sm:$0xff]
        %v1627 = vld [vmem:[%s1618 + $0x40] sm:$0xff]
        %v1628 = vld [vmem:[%s1618 + $0x48] sm:$0xff]
        %v1629 = vld [vmem:[%s1618 + $0x50] sm:$0xff]
        %v1630 = vld [vmem:[%s1618 + $0x58] sm:$0xff]
        %v1631 = vld [vmem:[%s1618 + $0x60] sm:$0xff]
        %v1632 = vld [vmem:[%s1618 + $0x68] sm:$0xff]
        %v1633 = vld [vmem:[%s1618 + $0x70] sm:$0xff]
        %v1634 = vld [vmem:[%s1618 + $0x78] sm:$0xff]
        %1636 = vset.pattern.permute.xlu0 0
        %1637 = vperm.xlu0 %1636, %v1619
        %v1638 = vpop.permute.xlu0 %1637
        %1641 = vset.pattern.permute.xlu0 0
        %1642 = vperm.xlu0 %1641, %v1620
        %v1643 = vpop.permute.xlu0 %1642
        %1646 = vset.pattern.permute.xlu0 0
        %1647 = vperm.xlu0 %1646, %v1621
        %v1648 = vpop.permute.xlu0 %1647
        %1651 = vset.pattern.permute.xlu0 0
        %1652 = vperm.xlu0 %1651, %v1622
        %v1653 = vpop.permute.xlu0 %1652
        %1656 = vset.pattern.permute.xlu0 0
        %1657 = vperm.xlu0 %1656, %v1623
        %v1658 = vpop.permute.xlu0 %1657
        %1661 = vset.pattern.permute.xlu0 0
        %1662 = vperm.xlu0 %1661, %v1624
        %v1663 = vpop.permute.xlu0 %1662
        %1666 = vset.pattern.permute.xlu0 0
        %1667 = vperm.xlu0 %1666, %v1625
        %v1668 = vpop.permute.xlu0 %1667
        %1671 = vset.pattern.permute.xlu0 0
        %1672 = vperm.xlu0 %1671, %v1626
        %v1673 = vpop.permute.xlu0 %1672
        %1676 = vset.pattern.permute.xlu0 0
        %1677 = vperm.xlu0 %1676, %v1627
        %v1678 = vpop.permute.xlu0 %1677
        %1681 = vset.pattern.permute.xlu0 0
        %1682 = vperm.xlu0 %1681, %v1628
        %v1683 = vpop.permute.xlu0 %1682
        %1686 = vset.pattern.permute.xlu0 0
        %1687 = vperm.xlu0 %1686, %v1629
        %v1688 = vpop.permute.xlu0 %1687
        %1691 = vset.pattern.permute.xlu0 0
        %1692 = vperm.xlu0 %1691, %v1630
        %v1693 = vpop.permute.xlu0 %1692
        %1696 = vset.pattern.permute.xlu0 0
        %1697 = vperm.xlu0 %1696, %v1631
        %v1698 = vpop.permute.xlu0 %1697
        %1701 = vset.pattern.permute.xlu0 0
        %1702 = vperm.xlu0 %1701, %v1632
        %v1703 = vpop.permute.xlu0 %1702
        %1706 = vset.pattern.permute.xlu0 0
        %1707 = vperm.xlu0 %1706, %v1633
        %v1708 = vpop.permute.xlu0 %1707
        %1711 = vset.pattern.permute.xlu0 0
        %1712 = vperm.xlu0 %1711, %v1634
        %v1713 = vpop.permute.xlu0 %1712
        %v1715 = vmul.f32 %v1579, %v1638
        %v1716 = vmul.f32 %v1581, %v1643
        %v1717 = vmul.f32 %v1584, %v1648
        %v1718 = vmul.f32 %v1586, %v1653
        %v1719 = vmul.f32 %v1589, %v1658
        %v1720 = vmul.f32 %v1591, %v1663
        %v1721 = vmul.f32 %v1594, %v1668
        %v1722 = vmul.f32 %v1596, %v1673
        %v1723 = vmul.f32 %v1599, %v1678
        %v1724 = vmul.f32 %v1601, %v1683
        %v1725 = vmul.f32 %v1604, %v1688
        %v1726 = vmul.f32 %v1606, %v1693
        %v1727 = vmul.f32 %v1609, %v1698
        %v1728 = vmul.f32 %v1611, %v1703
        %v1729 = vmul.f32 %v1614, %v1708
        %v1730 = vmul.f32 %v1616, %v1713
        %s1731 = scalar_lea.vmem %s3, 384
        %v1732 = vld [vmem:[%s1731] sm:$0xff]
        %v1733 = vld [vmem:[%s1731 + $0x8] sm:$0xff]
        %v1734 = vld [vmem:[%s1731 + $0x10] sm:$0xff]
        %v1735 = vld [vmem:[%s1731 + $0x18] sm:$0xff]
        %v1736 = vld [vmem:[%s1731 + $0x20] sm:$0xff]
        %v1737 = vld [vmem:[%s1731 + $0x28] sm:$0xff]
        %v1738 = vld [vmem:[%s1731 + $0x30] sm:$0xff]
        %v1739 = vld [vmem:[%s1731 + $0x38] sm:$0xff]
        %v1740 = vld [vmem:[%s1731 + $0x40] sm:$0xff]
        %v1741 = vld [vmem:[%s1731 + $0x48] sm:$0xff]
        %v1742 = vld [vmem:[%s1731 + $0x50] sm:$0xff]
        %v1743 = vld [vmem:[%s1731 + $0x58] sm:$0xff]
        %v1744 = vld [vmem:[%s1731 + $0x60] sm:$0xff]
        %v1745 = vld [vmem:[%s1731 + $0x68] sm:$0xff]
        %v1746 = vld [vmem:[%s1731 + $0x70] sm:$0xff]
        %v1747 = vld [vmem:[%s1731 + $0x78] sm:$0xff]
        %1749 = vset.pattern.permute.xlu0 0
        %1750 = vperm.xlu0 %1749, %v1732
        %v1751 = vpop.permute.xlu0 %1750
        %1754 = vset.pattern.permute.xlu0 0
        %1755 = vperm.xlu0 %1754, %v1733
        %v1756 = vpop.permute.xlu0 %1755
        %1759 = vset.pattern.permute.xlu0 0
        %1760 = vperm.xlu0 %1759, %v1734
        %v1761 = vpop.permute.xlu0 %1760
        %1764 = vset.pattern.permute.xlu0 0
        %1765 = vperm.xlu0 %1764, %v1735
        %v1766 = vpop.permute.xlu0 %1765
        %1769 = vset.pattern.permute.xlu0 0
        %1770 = vperm.xlu0 %1769, %v1736
        %v1771 = vpop.permute.xlu0 %1770
        %1774 = vset.pattern.permute.xlu0 0
        %1775 = vperm.xlu0 %1774, %v1737
        %v1776 = vpop.permute.xlu0 %1775
        %1779 = vset.pattern.permute.xlu0 0
        %1780 = vperm.xlu0 %1779, %v1738
        %v1781 = vpop.permute.xlu0 %1780
        %1784 = vset.pattern.permute.xlu0 0
        %1785 = vperm.xlu0 %1784, %v1739
        %v1786 = vpop.permute.xlu0 %1785
        %1789 = vset.pattern.permute.xlu0 0
        %1790 = vperm.xlu0 %1789, %v1740
        %v1791 = vpop.permute.xlu0 %1790
        %1794 = vset.pattern.permute.xlu0 0
        %1795 = vperm.xlu0 %1794, %v1741
        %v1796 = vpop.permute.xlu0 %1795
        %1799 = vset.pattern.permute.xlu0 0
        %1800 = vperm.xlu0 %1799, %v1742
        %v1801 = vpop.permute.xlu0 %1800
        %1804 = vset.pattern.permute.xlu0 0
        %1805 = vperm.xlu0 %1804, %v1743
        %v1806 = vpop.permute.xlu0 %1805
        %1809 = vset.pattern.permute.xlu0 0
        %1810 = vperm.xlu0 %1809, %v1744
        %v1811 = vpop.permute.xlu0 %1810
        %1814 = vset.pattern.permute.xlu0 0
        %1815 = vperm.xlu0 %1814, %v1745
        %v1816 = vpop.permute.xlu0 %1815
        %1819 = vset.pattern.permute.xlu0 0
        %1820 = vperm.xlu0 %1819, %v1746
        %v1821 = vpop.permute.xlu0 %1820
        %1824 = vset.pattern.permute.xlu0 0
        %1825 = vperm.xlu0 %1824, %v1747
        %v1826 = vpop.permute.xlu0 %1825
        %v1828 = vadd.f32 %v1715, %v1751
        %v1829 = vadd.f32 %v1716, %v1756
        %v1830 = vadd.f32 %v1717, %v1761
        %v1831 = vadd.f32 %v1718, %v1766
        %v1832 = vadd.f32 %v1719, %v1771
        %v1833 = vadd.f32 %v1720, %v1776
        %v1834 = vadd.f32 %v1721, %v1781
        %v1835 = vadd.f32 %v1722, %v1786
        %v1836 = vadd.f32 %v1723, %v1791
        %v1837 = vadd.f32 %v1724, %v1796
        %v1838 = vadd.f32 %v1725, %v1801
        %v1839 = vadd.f32 %v1726, %v1806
        %v1840 = vadd.f32 %v1727, %v1811
        %v1841 = vadd.f32 %v1728, %v1816
        %v1842 = vadd.f32 %v1729, %v1821
        %v1843 = vadd.f32 %v1730, %v1826
        %v1844 = vmax.f32 %v1828, 0.0
        %v1845 = vmax.f32 %v1829, 0.0
        %v1846 = vmax.f32 %v1830, 0.0
        %v1847 = vmax.f32 %v1831, 0.0
        %v1848 = vmax.f32 %v1832, 0.0
        %v1849 = vmax.f32 %v1833, 0.0
        %v1850 = vmax.f32 %v1834, 0.0
        %v1851 = vmax.f32 %v1835, 0.0
        %v1852 = vmax.f32 %v1836, 0.0
        %v1853 = vmax.f32 %v1837, 0.0
        %v1854 = vmax.f32 %v1838, 0.0
        %v1855 = vmax.f32 %v1839, 0.0
        %v1856 = vmax.f32 %v1840, 0.0
        %v1857 = vmax.f32 %v1841, 0.0
        %v1858 = vmax.f32 %v1842, 0.0
        %v1859 = vmax.f32 %v1843, 0.0
        %v1860 = vld [vmem:[%s1066] sm:$0xff]
        %v1861 = vld [vmem:[%s1066 + $0x8] sm:$0xff]
        %v1862 = vld [vmem:[%s1066 + $0x10] sm:$0xff]
        %v1863 = vld [vmem:[%s1066 + $0x18] sm:$0xff]
        %v1864 = vld [vmem:[%s1066 + $0x20] sm:$0xff]
        %v1865 = vld [vmem:[%s1066 + $0x28] sm:$0xff]
        %v1866 = vld [vmem:[%s1066 + $0x30] sm:$0xff]
        %v1867 = vld [vmem:[%s1066 + $0x38] sm:$0xff]
        %v1868 = vld [vmem:[%s1066 + $0x40] sm:$0xff]
        %v1869 = vld [vmem:[%s1066 + $0x48] sm:$0xff]
        %v1870 = vld [vmem:[%s1066 + $0x50] sm:$0xff]
        %v1871 = vld [vmem:[%s1066 + $0x58] sm:$0xff]
        %v1872 = vld [vmem:[%s1066 + $0x60] sm:$0xff]
        %v1873 = vld [vmem:[%s1066 + $0x68] sm:$0xff]
        %v1874 = vld [vmem:[%s1066 + $0x70] sm:$0xff]
        %v1875 = vld [vmem:[%s1066 + $0x78] sm:$0xff]
        %v1876 = vadd.f32 %v1844, %v1860
        %v1877 = vadd.f32 %v1845, %v1861
        %v1878 = vadd.f32 %v1846, %v1862
        %v1879 = vadd.f32 %v1847, %v1863
        %v1880 = vadd.f32 %v1848, %v1864
        %v1881 = vadd.f32 %v1849, %v1865
        %v1882 = vadd.f32 %v1850, %v1866
        %v1883 = vadd.f32 %v1851, %v1867
        %v1884 = vadd.f32 %v1852, %v1868
        %v1885 = vadd.f32 %v1853, %v1869
        %v1886 = vadd.f32 %v1854, %v1870
        %v1887 = vadd.f32 %v1855, %v1871
        %v1888 = vadd.f32 %v1856, %v1872
        %v1889 = vadd.f32 %v1857, %v1873
        %v1890 = vadd.f32 %v1858, %v1874
        %v1891 = vadd.f32 %v1859, %v1875
        %v1892 = vpack.c.bf16 %v1877, %v1876
        %v1893 = vpack.c.bf16 %v1879, %v1878
        %v1894 = vpack.c.bf16 %v1881, %v1880
        %v1895 = vpack.c.bf16 %v1883, %v1882
        %v1896 = vpack.c.bf16 %v1885, %v1884
        %v1897 = vpack.c.bf16 %v1887, %v1886
        %v1898 = vpack.c.bf16 %v1889, %v1888
        %v1899 = vpack.c.bf16 %v1891, %v1890
        %s1900 = scalar_lea.vmem %s1, 256
        %v1901 = vld [vmem:[%s1900] sm:$0xf]
        %v1902 = vld [vmem:[%s1900 + $0x4] sm:$0xf]
        %v1903 = vld [vmem:[%s1900 + $0x8] sm:$0xf]
        %v1904 = vld [vmem:[%s1900 + $0xc] sm:$0xf]
        %v1905 = vld [vmem:[%s1900 + $0x10] sm:$0xf]
        %v1906 = vld [vmem:[%s1900 + $0x14] sm:$0xf]
        %v1907 = vld [vmem:[%s1900 + $0x18] sm:$0xf]
        %v1908 = vld [vmem:[%s1900 + $0x1c] sm:$0xf]
        %v1909 = vld [vmem:[%s1900 + $0x20] sm:$0xf]
        %v1910 = vld [vmem:[%s1900 + $0x24] sm:$0xf]
        %v1911 = vld [vmem:[%s1900 + $0x28] sm:$0xf]
        %v1912 = vld [vmem:[%s1900 + $0x2c] sm:$0xf]
        %v1913 = vld [vmem:[%s1900 + $0x30] sm:$0xf]
        %v1914 = vld [vmem:[%s1900 + $0x34] sm:$0xf]
        %v1915 = vld [vmem:[%s1900 + $0x38] sm:$0xf]
        %v1916 = vld [vmem:[%s1900 + $0x3c] sm:$0xf]
        %v1933 = vunpack.c.l.b16 %v1901
        %v1934 = vunpack.c.l.b16 %v1902
        %v1935 = vunpack.c.l.b16 %v1903
        %v1936 = vunpack.c.l.b16 %v1904
        %v1937 = vunpack.c.l.b16 %v1905
        %v1938 = vunpack.c.l.b16 %v1906
        %v1939 = vunpack.c.l.b16 %v1907
        %v1940 = vunpack.c.l.b16 %v1908
        %v1941 = vunpack.c.l.b16 %v1909
        %v1942 = vunpack.c.l.b16 %v1910
        %v1943 = vunpack.c.l.b16 %v1911
        %v1944 = vunpack.c.l.b16 %v1912
        %v1945 = vunpack.c.l.b16 %v1913
        %v1946 = vunpack.c.l.b16 %v1914
        %v1947 = vunpack.c.l.b16 %v1915
        %v1948 = vunpack.c.l.b16 %v1916
        %v1949 = vpack.c.b16 %v1934, %v1933
        %v1950 = vpack.c.b16 %v1936, %v1935
        %v1951 = vpack.c.b16 %v1938, %v1937
        %v1952 = vpack.c.b16 %v1940, %v1939
        %v1953 = vpack.c.b16 %v1942, %v1941
        %v1954 = vpack.c.b16 %v1944, %v1943
        %v1955 = vpack.c.b16 %v1946, %v1945
        %v1956 = vpack.c.b16 %v1948, %v1947
        %1965 = vmatpush.bf16.msra.mxu0 %v1899
        %1966 = vmatpush.bf16.msra.mxu0 %v1898
        %1967 = vmatpush.bf16.msra.mxu0 %v1897
        %1968 = vmatpush.bf16.msra.mxu0 %v1896
        %1969 = vmatpush.bf16.msra.mxu0 %v1895
        %1970 = vmatpush.bf16.msra.mxu0 %v1894
        %1971 = vmatpush.bf16.msra.mxu0 %v1893
        %1972 = vmatpush.bf16.msra.mxu0 %v1892
        %1973 = vmatmul.bf16.gmra.mxu0 %v1949
        %v1974 = vpop.f32.mrf.mxu0
        %v1975 = vadd.f32 0.0, %v1974
        %v1976 = vpop.f32.mrf.mxu0
        %v1977 = vadd.f32 0.0, %v1976
        %1978 = vmatmul.bf16.gmra.mxu0 %v1950
        %v1979 = vpop.f32.mrf.mxu0
        %v1980 = vadd.f32 0.0, %v1979
        %v1981 = vpop.f32.mrf.mxu0
        %v1982 = vadd.f32 0.0, %v1981
        %1983 = vmatmul.bf16.gmra.mxu0 %v1951
        %v1984 = vpop.f32.mrf.mxu0
        %v1985 = vadd.f32 0.0, %v1984
        %v1986 = vpop.f32.mrf.mxu0
        %v1987 = vadd.f32 0.0, %v1986
        %1988 = vmatmul.bf16.gmra.mxu0 %v1952
        %v1989 = vpop.f32.mrf.mxu0
        %v1990 = vadd.f32 0.0, %v1989
        %v1991 = vpop.f32.mrf.mxu0
        %v1992 = vadd.f32 0.0, %v1991
        %1993 = vmatmul.bf16.gmra.mxu0 %v1953
        %v1994 = vpop.f32.mrf.mxu0
        %v1995 = vadd.f32 0.0, %v1994
        %v1996 = vpop.f32.mrf.mxu0
        %v1997 = vadd.f32 0.0, %v1996
        %1998 = vmatmul.bf16.gmra.mxu0 %v1954
        %v1999 = vpop.f32.mrf.mxu0
        %v2000 = vadd.f32 0.0, %v1999
        %v2001 = vpop.f32.mrf.mxu0
        %v2002 = vadd.f32 0.0, %v2001
        %2003 = vmatmul.bf16.gmra.mxu0 %v1955
        %v2004 = vpop.f32.mrf.mxu0
        %v2005 = vadd.f32 0.0, %v2004
        %v2006 = vpop.f32.mrf.mxu0
        %v2007 = vadd.f32 0.0, %v2006
        %2008 = vmatmul.bf16.gmra.mxu0 %v1956
        %v2009 = vpop.f32.mrf.mxu0
        %v2010 = vadd.f32 0.0, %v2009
        %v2011 = vpop.f32.mrf.mxu0
        %v2012 = vadd.f32 0.0, %v2011
        %2013 = vdwg.mxu0
        %s2014 = scalar_lea.vmem %s2, 512
        %v2015 = vld [vmem:[%s2014] sm:$0xff]
        %v2016 = vld [vmem:[%s2014 + $0x8] sm:$0xff]
        %v2017 = vld [vmem:[%s2014 + $0x10] sm:$0xff]
        %v2018 = vld [vmem:[%s2014 + $0x18] sm:$0xff]
        %v2019 = vld [vmem:[%s2014 + $0x20] sm:$0xff]
        %v2020 = vld [vmem:[%s2014 + $0x28] sm:$0xff]
        %v2021 = vld [vmem:[%s2014 + $0x30] sm:$0xff]
        %v2022 = vld [vmem:[%s2014 + $0x38] sm:$0xff]
        %v2023 = vld [vmem:[%s2014 + $0x40] sm:$0xff]
        %v2024 = vld [vmem:[%s2014 + $0x48] sm:$0xff]
        %v2025 = vld [vmem:[%s2014 + $0x50] sm:$0xff]
        %v2026 = vld [vmem:[%s2014 + $0x58] sm:$0xff]
        %v2027 = vld [vmem:[%s2014 + $0x60] sm:$0xff]
        %v2028 = vld [vmem:[%s2014 + $0x68] sm:$0xff]
        %v2029 = vld [vmem:[%s2014 + $0x70] sm:$0xff]
        %v2030 = vld [vmem:[%s2014 + $0x78] sm:$0xff]
        %2032 = vset.pattern.permute.xlu0 0
        %2033 = vperm.xlu0 %2032, %v2015
        %v2034 = vpop.permute.xlu0 %2033
        %2037 = vset.pattern.permute.xlu0 0
        %2038 = vperm.xlu0 %2037, %v2016
        %v2039 = vpop.permute.xlu0 %2038
        %2042 = vset.pattern.permute.xlu0 0
        %2043 = vperm.xlu0 %2042, %v2017
        %v2044 = vpop.permute.xlu0 %2043
        %2047 = vset.pattern.permute.xlu0 0
        %2048 = vperm.xlu0 %2047, %v2018
        %v2049 = vpop.permute.xlu0 %2048
        %2052 = vset.pattern.permute.xlu0 0
        %2053 = vperm.xlu0 %2052, %v2019
        %v2054 = vpop.permute.xlu0 %2053
        %2057 = vset.pattern.permute.xlu0 0
        %2058 = vperm.xlu0 %2057, %v2020
        %v2059 = vpop.permute.xlu0 %2058
        %2062 = vset.pattern.permute.xlu0 0
        %2063 = vperm.xlu0 %2062, %v2021
        %v2064 = vpop.permute.xlu0 %2063
        %2067 = vset.pattern.permute.xlu0 0
        %2068 = vperm.xlu0 %2067, %v2022
        %v2069 = vpop.permute.xlu0 %2068
        %2072 = vset.pattern.permute.xlu0 0
        %2073 = vperm.xlu0 %2072, %v2023
        %v2074 = vpop.permute.xlu0 %2073
        %2077 = vset.pattern.permute.xlu0 0
        %2078 = vperm.xlu0 %2077, %v2024
        %v2079 = vpop.permute.xlu0 %2078
        %2082 = vset.pattern.permute.xlu0 0
        %2083 = vperm.xlu0 %2082, %v2025
        %v2084 = vpop.permute.xlu0 %2083
        %2087 = vset.pattern.permute.xlu0 0
        %2088 = vperm.xlu0 %2087, %v2026
        %v2089 = vpop.permute.xlu0 %2088
        %2092 = vset.pattern.permute.xlu0 0
        %2093 = vperm.xlu0 %2092, %v2027
        %v2094 = vpop.permute.xlu0 %2093
        %2097 = vset.pattern.permute.xlu0 0
        %2098 = vperm.xlu0 %2097, %v2028
        %v2099 = vpop.permute.xlu0 %2098
        %2102 = vset.pattern.permute.xlu0 0
        %2103 = vperm.xlu0 %2102, %v2029
        %v2104 = vpop.permute.xlu0 %2103
        %2107 = vset.pattern.permute.xlu0 0
        %2108 = vperm.xlu0 %2107, %v2030
        %v2109 = vpop.permute.xlu0 %2108
        %v2111 = vmul.f32 %v1975, %v2034
        %v2112 = vmul.f32 %v1977, %v2039
        %v2113 = vmul.f32 %v1980, %v2044
        %v2114 = vmul.f32 %v1982, %v2049
        %v2115 = vmul.f32 %v1985, %v2054
        %v2116 = vmul.f32 %v1987, %v2059
        %v2117 = vmul.f32 %v1990, %v2064
        %v2118 = vmul.f32 %v1992, %v2069
        %v2119 = vmul.f32 %v1995, %v2074
        %v2120 = vmul.f32 %v1997, %v2079
        %v2121 = vmul.f32 %v2000, %v2084
        %v2122 = vmul.f32 %v2002, %v2089
        %v2123 = vmul.f32 %v2005, %v2094
        %v2124 = vmul.f32 %v2007, %v2099
        %v2125 = vmul.f32 %v2010, %v2104
        %v2126 = vmul.f32 %v2012, %v2109
        %s2127 = scalar_lea.vmem %s3, 512
        %v2128 = vld [vmem:[%s2127] sm:$0xff]
        %v2129 = vld [vmem:[%s2127 + $0x8] sm:$0xff]
        %v2130 = vld [vmem:[%s2127 + $0x10] sm:$0xff]
        %v2131 = vld [vmem:[%s2127 + $0x18] sm:$0xff]
        %v2132 = vld [vmem:[%s2127 + $0x20] sm:$0xff]
        %v2133 = vld [vmem:[%s2127 + $0x28] sm:$0xff]
        %v2134 = vld [vmem:[%s2127 + $0x30] sm:$0xff]
        %v2135 = vld [vmem:[%s2127 + $0x38] sm:$0xff]
        %v2136 = vld [vmem:[%s2127 + $0x40] sm:$0xff]
        %v2137 = vld [vmem:[%s2127 + $0x48] sm:$0xff]
        %v2138 = vld [vmem:[%s2127 + $0x50] sm:$0xff]
        %v2139 = vld [vmem:[%s2127 + $0x58] sm:$0xff]
        %v2140 = vld [vmem:[%s2127 + $0x60] sm:$0xff]
        %v2141 = vld [vmem:[%s2127 + $0x68] sm:$0xff]
        %v2142 = vld [vmem:[%s2127 + $0x70] sm:$0xff]
        %v2143 = vld [vmem:[%s2127 + $0x78] sm:$0xff]
        %2145 = vset.pattern.permute.xlu0 0
        %2146 = vperm.xlu0 %2145, %v2128
        %v2147 = vpop.permute.xlu0 %2146
        %2150 = vset.pattern.permute.xlu0 0
        %2151 = vperm.xlu0 %2150, %v2129
        %v2152 = vpop.permute.xlu0 %2151
        %2155 = vset.pattern.permute.xlu0 0
        %2156 = vperm.xlu0 %2155, %v2130
        %v2157 = vpop.permute.xlu0 %2156
        %2160 = vset.pattern.permute.xlu0 0
        %2161 = vperm.xlu0 %2160, %v2131
        %v2162 = vpop.permute.xlu0 %2161
        %2165 = vset.pattern.permute.xlu0 0
        %2166 = vperm.xlu0 %2165, %v2132
        %v2167 = vpop.permute.xlu0 %2166
        %2170 = vset.pattern.permute.xlu0 0
        %2171 = vperm.xlu0 %2170, %v2133
        %v2172 = vpop.permute.xlu0 %2171
        %2175 = vset.pattern.permute.xlu0 0
        %2176 = vperm.xlu0 %2175, %v2134
        %v2177 = vpop.permute.xlu0 %2176
        %2180 = vset.pattern.permute.xlu0 0
        %2181 = vperm.xlu0 %2180, %v2135
        %v2182 = vpop.permute.xlu0 %2181
        %2185 = vset.pattern.permute.xlu0 0
        %2186 = vperm.xlu0 %2185, %v2136
        %v2187 = vpop.permute.xlu0 %2186
        %2190 = vset.pattern.permute.xlu0 0
        %2191 = vperm.xlu0 %2190, %v2137
        %v2192 = vpop.permute.xlu0 %2191
        %2195 = vset.pattern.permute.xlu0 0
        %2196 = vperm.xlu0 %2195, %v2138
        %v2197 = vpop.permute.xlu0 %2196
        %2200 = vset.pattern.permute.xlu0 0
        %2201 = vperm.xlu0 %2200, %v2139
        %v2202 = vpop.permute.xlu0 %2201
        %2205 = vset.pattern.permute.xlu0 0
        %2206 = vperm.xlu0 %2205, %v2140
        %v2207 = vpop.permute.xlu0 %2206
        %2210 = vset.pattern.permute.xlu0 0
        %2211 = vperm.xlu0 %2210, %v2141
        %v2212 = vpop.permute.xlu0 %2211
        %2215 = vset.pattern.permute.xlu0 0
        %2216 = vperm.xlu0 %2215, %v2142
        %v2217 = vpop.permute.xlu0 %2216
        %2220 = vset.pattern.permute.xlu0 0
        %2221 = vperm.xlu0 %2220, %v2143
        %v2222 = vpop.permute.xlu0 %2221
        %v2224 = vadd.f32 %v2111, %v2147
        %v2225 = vadd.f32 %v2112, %v2152
        %v2226 = vadd.f32 %v2113, %v2157
        %v2227 = vadd.f32 %v2114, %v2162
        %v2228 = vadd.f32 %v2115, %v2167
        %v2229 = vadd.f32 %v2116, %v2172
        %v2230 = vadd.f32 %v2117, %v2177
        %v2231 = vadd.f32 %v2118, %v2182
        %v2232 = vadd.f32 %v2119, %v2187
        %v2233 = vadd.f32 %v2120, %v2192
        %v2234 = vadd.f32 %v2121, %v2197
        %v2235 = vadd.f32 %v2122, %v2202
        %v2236 = vadd.f32 %v2123, %v2207
        %v2237 = vadd.f32 %v2124, %v2212
        %v2238 = vadd.f32 %v2125, %v2217
        %v2239 = vadd.f32 %v2126, %v2222
        %v2240 = vmax.f32 %v2224, 0.0
        %v2241 = vmax.f32 %v2225, 0.0
        %v2242 = vmax.f32 %v2226, 0.0
        %v2243 = vmax.f32 %v2227, 0.0
        %v2244 = vmax.f32 %v2228, 0.0
        %v2245 = vmax.f32 %v2229, 0.0
        %v2246 = vmax.f32 %v2230, 0.0
        %v2247 = vmax.f32 %v2231, 0.0
        %v2248 = vmax.f32 %v2232, 0.0
        %v2249 = vmax.f32 %v2233, 0.0
        %v2250 = vmax.f32 %v2234, 0.0
        %v2251 = vmax.f32 %v2235, 0.0
        %v2252 = vmax.f32 %v2236, 0.0
        %v2253 = vmax.f32 %v2237, 0.0
        %v2254 = vmax.f32 %v2238, 0.0
        %v2255 = vmax.f32 %v2239, 0.0
        %v2256 = vld [vmem:[%s1479] sm:$0xff]
        %v2257 = vld [vmem:[%s1479 + $0x8] sm:$0xff]
        %v2258 = vld [vmem:[%s1479 + $0x10] sm:$0xff]
        %v2259 = vld [vmem:[%s1479 + $0x18] sm:$0xff]
        %v2260 = vld [vmem:[%s1479 + $0x20] sm:$0xff]
        %v2261 = vld [vmem:[%s1479 + $0x28] sm:$0xff]
        %v2262 = vld [vmem:[%s1479 + $0x30] sm:$0xff]
        %v2263 = vld [vmem:[%s1479 + $0x38] sm:$0xff]
        %v2264 = vld [vmem:[%s1479 + $0x40] sm:$0xff]
        %v2265 = vld [vmem:[%s1479 + $0x48] sm:$0xff]
        %v2266 = vld [vmem:[%s1479 + $0x50] sm:$0xff]
        %v2267 = vld [vmem:[%s1479 + $0x58] sm:$0xff]
        %v2268 = vld [vmem:[%s1479 + $0x60] sm:$0xff]
        %v2269 = vld [vmem:[%s1479 + $0x68] sm:$0xff]
        %v2270 = vld [vmem:[%s1479 + $0x70] sm:$0xff]
        %v2271 = vld [vmem:[%s1479 + $0x78] sm:$0xff]
        %v2272 = vadd.f32 %v2240, %v2256
        %v2273 = vadd.f32 %v2241, %v2257
        %v2274 = vadd.f32 %v2242, %v2258
        %v2275 = vadd.f32 %v2243, %v2259
        %v2276 = vadd.f32 %v2244, %v2260
        %v2277 = vadd.f32 %v2245, %v2261
        %v2278 = vadd.f32 %v2246, %v2262
        %v2279 = vadd.f32 %v2247, %v2263
        %v2280 = vadd.f32 %v2248, %v2264
        %v2281 = vadd.f32 %v2249, %v2265
        %v2282 = vadd.f32 %v2250, %v2266
        %v2283 = vadd.f32 %v2251, %v2267
        %v2284 = vadd.f32 %v2252, %v2268
        %v2285 = vadd.f32 %v2253, %v2269
        %v2286 = vadd.f32 %v2254, %v2270
        %v2287 = vadd.f32 %v2255, %v2271
        %v2288 = vld [vmem:[#allocation2] sm:$0xff]
        %v2289 = vld [vmem:[#allocation2 + $0x8] sm:$0xff]
        %v2290 = vld [vmem:[#allocation2 + $0x10] sm:$0xff]
        %v2291 = vld [vmem:[#allocation2 + $0x18] sm:$0xff]
        %v2292 = vld [vmem:[#allocation2 + $0x20] sm:$0xff]
        %v2293 = vld [vmem:[#allocation2 + $0x28] sm:$0xff]
        %v2294 = vld [vmem:[#allocation2 + $0x30] sm:$0xff]
        %v2295 = vld [vmem:[#allocation2 + $0x38] sm:$0xff]
        %v2296 = vld [vmem:[#allocation2 + $0x40] sm:$0xff]
        %v2297 = vld [vmem:[#allocation2 + $0x48] sm:$0xff]
        %v2298 = vld [vmem:[#allocation2 + $0x50] sm:$0xff]
        %v2299 = vld [vmem:[#allocation2 + $0x58] sm:$0xff]
        %v2300 = vld [vmem:[#allocation2 + $0x60] sm:$0xff]
        %v2301 = vld [vmem:[#allocation2 + $0x68] sm:$0xff]
        %v2302 = vld [vmem:[#allocation2 + $0x70] sm:$0xff]
        %v2303 = vld [vmem:[#allocation2 + $0x78] sm:$0xff]
        %v2304 = vadd.f32 %v2272, %v2288
        %v2305 = vadd.f32 %v2273, %v2289
        %v2306 = vadd.f32 %v2274, %v2290
        %v2307 = vadd.f32 %v2275, %v2291
        %v2308 = vadd.f32 %v2276, %v2292
        %v2309 = vadd.f32 %v2277, %v2293
        %v2310 = vadd.f32 %v2278, %v2294
        %v2311 = vadd.f32 %v2279, %v2295
        %v2312 = vadd.f32 %v2280, %v2296
        %v2313 = vadd.f32 %v2281, %v2297
        %v2314 = vadd.f32 %v2282, %v2298
        %v2315 = vadd.f32 %v2283, %v2299
        %v2316 = vadd.f32 %v2284, %v2300
        %v2317 = vadd.f32 %v2285, %v2301
        %v2318 = vadd.f32 %v2286, %v2302
        %v2319 = vadd.f32 %v2287, %v2303
        %2320 = vst [vmem:[%s308] sm:$0xff] %v2304
        %2321 = vst [vmem:[%s308 + $0x8] sm:$0xff] %v2305
        %2322 = vst [vmem:[%s308 + $0x10] sm:$0xff] %v2306
        %2323 = vst [vmem:[%s308 + $0x18] sm:$0xff] %v2307
        %2324 = vst [vmem:[%s308 + $0x20] sm:$0xff] %v2308
        %2325 = vst [vmem:[%s308 + $0x28] sm:$0xff] %v2309
        %2326 = vst [vmem:[%s308 + $0x30] sm:$0xff] %v2310
        %2327 = vst [vmem:[%s308 + $0x38] sm:$0xff] %v2311
        %2328 = vst [vmem:[%s308 + $0x40] sm:$0xff] %v2312
        %2329 = vst [vmem:[%s308 + $0x48] sm:$0xff] %v2313
        %2330 = vst [vmem:[%s308 + $0x50] sm:$0xff] %v2314
        %2331 = vst [vmem:[%s308 + $0x58] sm:$0xff] %v2315
        %2332 = vst [vmem:[%s308 + $0x60] sm:$0xff] %v2316
        %2333 = vst [vmem:[%s308 + $0x68] sm:$0xff] %v2317
        %2334 = vst [vmem:[%s308 + $0x70] sm:$0xff] %v2318
        %2335 = vst [vmem:[%s308 + $0x78] sm:$0xff] %v2319
        %s2336 = sand.u32 %s131, 1
        %s2337 = scalar_lea.sflag [#allocation5], %s2336
        %s2338 = sand.u32 %s131, 1
        %s2339 = smul.addr %s2338, 128
        %s2340 = scalar_lea.vmem [#allocation4], %s2339
        // Predicated region
        $region75: #{tpu_custom_call.1} parent=69 // pred_check
          %p2341 = pneg %p141
        $region76: #{tpu_custom_call.1} parent=69 // pred_check_branch
          %2343 = sbr.rel (%p2341) target = $region78
        $region77: #{tpu_custom_call.1} parent=69 // pred_region
          %2345 = vsyncadd %s2337, 0
          %s2346 = smul.addr %s22, 32
          %s2347 = sadd.s32 %s23, %s2346
          %s2348 = smul.addr %s2347, 8
          %s2349 = scalar_lea.hbm %s4, %s2348
          %s2350 = sshll.u32 %s2340, 4
          %s2351 = int_to_ptr.vmem [resolvable:$true] %s2350
          %s2352 = sshll.u32 %s2349, 4
          %s2353 = int_to_ptr.hbm [resolvable:$true] %s2352
          %2358 = dma.vmem_to_hbm [thread:$0]  %s2351, 2048, %s2353, %s2337, 128, 256, 8
        $region78: #{tpu_custom_call.1} parent=69 // pred_fallthru
          _
      $region70: #{tpu_custom_call.1} parent=5 // pred_fallthru
        _
      %p2359 = scmp.le.s32.totalorder 2, %s13
      // Predicated region
      $region79: #{tpu_custom_call.1} parent=5 // pred_check
        %p2360 = pneg %p2359
      $region80: #{tpu_custom_call.1} parent=5 // pred_check_branch
        %2362 = sbr.rel (%p2360) target = $region82
      $region81: #{tpu_custom_call.1} parent=5 // pred_region
        %s2363 = ssub.s32 %s13, 2
        // Predicated region
        $region83: #{tpu_custom_call.1} parent=81 // pred_check
          %p2364 = pneg %p147
        $region84: #{tpu_custom_call.1} parent=81 // pred_check_branch
          %2366 = sbr.rel (%p2364) target = $region86
        $region85: #{tpu_custom_call.1} parent=81 // pred_region
          %s2367 = sand.u32 %s132, 1
          %s2368 = scalar_lea.sflag [#allocation5], %s2367
          %s2369 = sand.u32 %s132, 1
          %s2370 = smul.addr %s2369, 128
          %s2371 = scalar_lea.vmem [#allocation4], %s2370
          %2373 = dma.done %s2368, 2048
        $region86: #{tpu_custom_call.1} parent=81 // pred_fallthru
          _
      $region82: #{tpu_custom_call.1} parent=5 // pred_fallthru
        _
    $region6: #{tpu_custom_call.1} parent=1 // loop_footer
      %s17 = sadd.s32 1, %s13
    $region7: #{tpu_custom_call.1} parent=1 // loop_footer_branch
      %12 = sbr.rel target = $region3
    $region8: #{tpu_custom_call.1} parent=1 // loop_exit
      _
    %2374 = vsyncpa [#allocation5], 1
    %s2375 = scalar_lea.sflag [#allocation5], 1
    %2376 = vsyncpa %s2375, 1

</llo_original>
